<compile_context>
chip_gen: v6e
topology: v6e:2x2x1
jax: 0.10.0
libtpu: 0.0.40
codegen_flags: <defaults>
</compile_context>

<pallas_src>
import functools

import jax
import jax.numpy as jnp
from jax.experimental import pallas as pl
from jax.experimental.pallas import tpu as pltpu


def _round_up(n, m):
    return ((n + m - 1) // m) * m


# ----------------------------------------------------------------------------
# Kernel: the whole forward pass fused in one body.
#   x (bt, 784) -> Linear(784,h)+LeakyReLU -> Linear(h,h)+LeakyReLU
#               -> fused head [mean | logvar | zero pad]  (bt, o_pad)
# Matmuls accumulate in f32; bias adds / activations / clip run on the VPU in
# f32 (safe on v5e which has no bf16 VPU path).
# ----------------------------------------------------------------------------
def encoder_kernel(x_ref, w1_ref, b1_ref, w2_ref, b2_ref, wh_ref, bh_ref,
                   out_ref, *, z_dim):
    dot_dtype = w1_ref.dtype
    x = x_ref[...].astype(dot_dtype)            # in-VMEM cast (no HBM cost)

    h = jnp.dot(x, w1_ref[...], preferred_element_type=jnp.float32) + b1_ref[...]
    h = jnp.maximum(h, 0.01 * h)                # LeakyReLU(0.01)
    h = h.astype(dot_dtype)
    h = jnp.dot(h, w2_ref[...], preferred_element_type=jnp.float32) + b2_ref[...]
    h = jnp.maximum(h, 0.01 * h)
    h = h.astype(dot_dtype)

    # Fused head: columns [0, z_dim) = mean, [z_dim, 2*z_dim) = logvar,
    # remaining lanes = zero padding (discarded by the wrapper slice).
    out = jnp.dot(h, wh_ref[...], preferred_element_type=jnp.float32) + bh_ref[...]
    col = jax.lax.broadcasted_iota(jnp.int32, out.shape, 1)
    # Hardtanh(-10, 4) only on the logvar (and pad, which is discarded) columns.
    out = jnp.where(col >= z_dim, jnp.clip(out, -10.0, 4.0), out)
    out_ref[...] = out.astype(out_ref.dtype)


# ----------------------------------------------------------------------------
# One-time weight preparation (call once, reuse every forward).
# ----------------------------------------------------------------------------
def prepare_params(params, dot_dtype=jnp.bfloat16):
    """Pad weights to lane-aligned shapes, fuse the mean/logvar head, and cast
    matmul operands to `dot_dtype` (bf16 default; biases stay f32).

    Zero padding is mathematically exact: padded h-columns stay 0 through
    LeakyReLU and contribute nothing downstream.
    """
    w1, b1, w2, b2 = params["w1"], params["b1"], params["w2"], params["b2"]
    wm, bm, wl, bl = params["wm"], params["bm"], params["wl"], params["bl"]

    d_in, h_dim = w1.shape
    z_dim = wm.shape[1]
    h_pad = _round_up(h_dim, 128)
    o_pad = _round_up(max(2 * z_dim, 128), 128)   # lane-dense fused output

    dd = jnp.dtype(dot_dtype)
    f32 = jnp.float32

    # w1 keeps its 784 input rows (x is passed unpadded); only output cols pad.
    w1_p = jnp.pad(w1, ((0, 0), (0, h_pad - h_dim))).astype(dd)
    b1_p = jnp.pad(b1, (0, h_pad - h_dim)).reshape(1, h_pad).astype(f32)
    w2_p = jnp.pad(w2, ((0, h_pad - h_dim), (0, h_pad - h_dim))).astype(dd)
    b2_p = jnp.pad(b2, (0, h_pad - h_dim)).reshape(1, h_pad).astype(f32)
    wh_p = jnp.pad(jnp.concatenate([wm, wl], axis=1),
                   ((0, h_pad - h_dim), (0, o_pad - 2 * z_dim))).astype(dd)
    bh_p = jnp.pad(jnp.concatenate([bm, bl]),
                   (0, o_pad - 2 * z_dim)).reshape(1, o_pad).astype(f32)

    return dict(w1=w1_p, b1=b1_p, w2=w2_p, b2=b2_p, wh=wh_p, bh=bh_p,
                d_in=d_in, h_dim=h_dim, z_dim=z_dim, h_pad=h_pad, o_pad=o_pad)


_VMEM_BUDGET = 24 << 20      # stay under the 32 MiB scoped default on v7x


def _select_batch_tile(B, row_bytes, weight_bytes, budget=_VMEM_BUDGET):
    # Prefer a single grid step: no per-step (~0.35us) pipeline overhead and no
    # duplicated weight DMA across v7x TensorCores.
    if 2 * weight_bytes + 2 * B * row_bytes <= budget:
        return B
    # Otherwise the largest multiple-of-8 divisor whose double-buffered tile
    # (plus weights) fits the budget.
    for cand in (8192, 4096, 2048, 1024, 512, 256, 128, 64, 32, 16, 8):
        if cand < B and B % cand == 0 and \
                2 * weight_bytes + 2 * cand * row_bytes <= budget:
            return cand
    return B   # awkward B: single big tile; caller raises vmem_limit_bytes


# ----------------------------------------------------------------------------
# Forward pass.
# ----------------------------------------------------------------------------
def encoder_mnist(x, prepared, *, batch_tile=None):
    """x: (B, 784).  `prepared` = prepare_params(...).
    Returns (z_q_mean, z_q_logvar), each (B, z_dim) float32."""
    B, D = x.shape
    p = prepared
    assert D == p["d_in"], f"expected input dim {p['d_in']}, got {D}"
    h_pad, o_pad, z_dim = p["h_pad"], p["o_pad"], p["z_dim"]

    w_arrays = (p["w1"], p["b1"], p["w2"], p["b2"], p["wh"], p["bh"])
    weight_bytes = sum(int(a.size) * a.dtype.itemsize for a in w_arrays)
    row_bytes = D * x.dtype.itemsize + o_pad * 4        # x row in + f32 row out

    if batch_tile is None:
        batch_tile = _select_batch_tile(B, row_bytes, weight_bytes)
    assert B % batch_tile == 0
    num_steps = B // batch_tile
    grid = (num_steps,)

    # Grid-invariant weights: single-buffer them when the grid actually
    # iterates (double-buffering them only wastes VMEM, esp. on v7x's 64 MiB).
    if num_steps > 1:
        def weight_spec(shape):
            return pl.BlockSpec(shape, lambda i: (0, 0),
                                pipeline_mode=pl.Buffered(1))
    else:
        def weight_spec(shape):
            return pl.BlockSpec(shape, lambda i: (0, 0))

    footprint = 2 * weight_bytes + 2 * batch_tile * row_bytes + (1 << 20)
    vmem_limit = footprint if footprint > (32 << 20) else None

    flops = 2 * B * (D * h_pad + h_pad * h_pad + h_pad * o_pad)
    # Weights are fetched once (invariant block index); x read + f32 writeback.
    bytes_accessed = B * D * x.dtype.itemsize + weight_bytes + B * o_pad * 4

    out = pl.pallas_call(
        functools.partial(encoder_kernel, z_dim=z_dim),
        out_shape=jax.ShapeDtypeStruct((B, o_pad), jnp.float32),
        grid_spec=pltpu.PrefetchScalarGridSpec(
            num_scalar_prefetch=0,
            grid=grid,
            in_specs=[
                pl.BlockSpec((batch_tile, D), lambda i: (i, 0)),  # x (784 = full dim)
                weight_spec((D, h_pad)),       # w1 (784 rows, padded cols)
                weight_spec((1, h_pad)),       # b1
                weight_spec((h_pad, h_pad)),   # w2
                weight_spec((1, h_pad)),       # b2
                weight_spec((h_pad, o_pad)),   # fused head weight [wm | wl]
                weight_spec((1, o_pad)),       # fused head bias   [bm | bl]
            ],
            out_specs=pl.BlockSpec((batch_tile, o_pad), lambda i: (i, 0)),
        ),
        compiler_params=pltpu.CompilerParams(
            dimension_semantics=("parallel",),
            vmem_limit_bytes=vmem_limit),
        cost_estimate=pl.CostEstimate(
            flops=flops, transcendentals=0, bytes_accessed=bytes_accessed),
    )(x, p["w1"], p["b1"], p["w2"], p["b2"], p["wh"], p["bh"])

    z_q_mean = out[:, :z_dim]
    z_q_logvar = out[:, z_dim:2 * z_dim]
    return z_q_mean, z_q_logvar


# ----------------------------------------------------------------------------
# Test helpers.
# ----------------------------------------------------------------------------
def init_params(key, h_dim, z_dim):
    """Deterministic init mimicking PyTorch Linear default U(-1/sqrt(fan_in), +)."""
    ks = jax.random.split(key, 8)

    def lin(kw, kb, fan_in, fan_out):
        bound = 1.0 / jnp.sqrt(fan_in)
        w = jax.random.uniform(kw, (fan_in, fan_out), jnp.float32, -bound, bound)
        b = jax.random.uniform(kb, (fan_out,), jnp.float32, -bound, bound)
        return w, b

    w1, b1 = lin(ks[0], ks[1], 784, h_dim)
    w2, b2 = lin(ks[2], ks[3], h_dim, h_dim)
    wm, bm = lin(ks[4], ks[5], h_dim, z_dim)
    wl, bl = lin(ks[6], ks[7], h_dim, z_dim)
    return dict(w1=w1, b1=b1, w2=w2, b2=b2, wm=wm, bm=bm, wl=wl, bl=bl)


def reference_forward(x, p):
    h = x @ p["w1"] + p["b1"]
    h = jnp.where(h >= 0, h, 0.01 * h)
    h = h @ p["w2"] + p["b2"]
    h = jnp.where(h >= 0, h, 0.01 * h)
    mean = h @ p["wm"] + p["bm"]
    logvar = jnp.clip(h @ p["wl"] + p["bl"], -10.0, 4.0)
    return mean, logvar


if __name__ == "__main__":
    key = jax.random.PRNGKey(0)
    k_x, k_p = jax.random.split(key)

    B, h_dim, z_dim = 128, 32, 8        # small shapes; input dim fixed at 784
    x = jax.random.normal(k_x, (B, 784), jnp.float32)
    params = init_params(k_p, h_dim, z_dim)
    ref_mean, ref_logvar = reference_forward(x, params)

    # Exact f32-operand path (strict tolerance).
    prep_f32 = prepare_params(params, dot_dtype=jnp.float32)
    m32, l32 = encoder_mnist(x, prep_f32)
    jax.block_until_ready((m32, l32))
    assert m32.shape == (B, z_dim) and l32.shape == (B, z_dim)
    assert jnp.allclose(m32, ref_mean, atol=1e-5, rtol=1e-5)
    assert jnp.allclose(l32, ref_logvar, atol=1e-5, rtol=1e-5)

    # Default path: bf16 matmul operands, f32 accumulation (HBM-roofline win on
    # v5e/v6e/v7x; weights cast once in prepare_params, x cast in VMEM).
    prep = prepare_params(params)
    m_bf, l_bf = encoder_mnist(x, prep)
    jax.block_until_ready((m_bf, l_bf))
    assert jnp.allclose(m_bf, ref_mean, atol=0.05, rtol=0.05)
    assert jnp.allclose(l_bf, ref_logvar, atol=0.05, rtol=0.05)

    print("KERNEL_OK")
</pallas_src>

<mosaic_0001>
module attributes {stable_mosaic.version = 11 : i64} {
  func.func @encoder_kernel(%arg0: i32, %arg1: memref<128x784xf32, #tpu.memory_space<vmem>>, %arg2: memref<784x128xf32, #tpu.memory_space<vmem>>, %arg3: memref<1x128xf32, #tpu.memory_space<vmem>>, %arg4: memref<128x128xf32, #tpu.memory_space<vmem>>, %arg5: memref<1x128xf32, #tpu.memory_space<vmem>>, %arg6: memref<128x128xf32, #tpu.memory_space<vmem>>, %arg7: memref<1x128xf32, #tpu.memory_space<vmem>>, %arg8: memref<128x128xf32, #tpu.memory_space<vmem>>) attributes {dimension_semantics = [#tpu.dimension_semantics<parallel>], iteration_bounds = array<i64: 1>, scalar_prefetch = 0 : i64, scratch_operands = 0 : i64, tpu.core_type = #tpu.core_type<tc>, window_params = [{transform_indices = @transform_0, window_bounds = array<i64: 128, 784>}, {pipeline_mode = #tpu.pipeline_mode<synchronous>, transform_indices = @transform_1, window_bounds = array<i64: 784, 128>}, {pipeline_mode = #tpu.pipeline_mode<synchronous>, transform_indices = @transform_2, window_bounds = array<i64: 1, 128>}, {pipeline_mode = #tpu.pipeline_mode<synchronous>, transform_indices = @transform_3, window_bounds = array<i64: 128, 128>}, {pipeline_mode = #tpu.pipeline_mode<synchronous>, transform_indices = @transform_4, window_bounds = array<i64: 1, 128>}, {pipeline_mode = #tpu.pipeline_mode<synchronous>, transform_indices = @transform_5, window_bounds = array<i64: 128, 128>}, {pipeline_mode = #tpu.pipeline_mode<synchronous>, transform_indices = @transform_6, window_bounds = array<i64: 1, 128>}, {transform_indices = @transform_7, window_bounds = array<i64: 128, 128>}]} {
    %c0 = arith.constant 0 : index
    %c0_0 = arith.constant 0 : index
    %0 = vector.load %arg1[%c0, %c0_0] : memref<128x784xf32, #tpu.memory_space<vmem>>, vector<128x784xf32>
    %c0_1 = arith.constant 0 : index
    %c0_2 = arith.constant 0 : index
    %1 = vector.load %arg2[%c0_1, %c0_2] : memref<784x128xf32, #tpu.memory_space<vmem>>, vector<784x128xf32>
    %cst = arith.constant dense<0.000000e+00> : vector<128x128xf32>
    %2 = tpu.matmul %0, %1, %cst {dimension_numbers = #tpu.dot_dimension_numbers<[1], [0], [0], [1], [0, 0, 1, 1], [], []>} : vector<128x784xf32>, vector<784x128xf32>, vector<128x128xf32> -> vector<128x128xf32>
    %c0_3 = arith.constant 0 : index
    %c0_4 = arith.constant 0 : index
    %3 = vector.load %arg3[%c0_3, %c0_4] : memref<1x128xf32, #tpu.memory_space<vmem>>, vector<1x128xf32>
    %4 = vector.broadcast %3 : vector<1x128xf32> to vector<128x128xf32>
    %5 = arith.addf %2, %4 : vector<128x128xf32>
    %cst_5 = arith.constant 0.00999999977 : f32
    %6 = vector.broadcast %cst_5 : f32 to vector<128x128xf32>
    %7 = arith.mulf %6, %5 : vector<128x128xf32>
    %8 = arith.maximumf %5, %7 : vector<128x128xf32>
    %c0_6 = arith.constant 0 : index
    %c0_7 = arith.constant 0 : index
    %9 = vector.load %arg4[%c0_6, %c0_7] : memref<128x128xf32, #tpu.memory_space<vmem>>, vector<128x128xf32>
    %cst_8 = arith.constant dense<0.000000e+00> : vector<128x128xf32>
    %10 = tpu.matmul %8, %9, %cst_8 {dimension_numbers = #tpu.dot_dimension_numbers<[1], [0], [0], [1], [0, 0, 1, 1], [], []>} : vector<128x128xf32>, vector<128x128xf32>, vector<128x128xf32> -> vector<128x128xf32>
    %c0_9 = arith.constant 0 : index
    %c0_10 = arith.constant 0 : index
    %11 = vector.load %arg5[%c0_9, %c0_10] : memref<1x128xf32, #tpu.memory_space<vmem>>, vector<1x128xf32>
    %12 = vector.broadcast %11 : vector<1x128xf32> to vector<128x128xf32>
    %13 = arith.addf %10, %12 : vector<128x128xf32>
    %cst_11 = arith.constant 0.00999999977 : f32
    %14 = vector.broadcast %cst_11 : f32 to vector<128x128xf32>
    %15 = arith.mulf %14, %13 : vector<128x128xf32>
    %16 = arith.maximumf %13, %15 : vector<128x128xf32>
    %c0_12 = arith.constant 0 : index
    %c0_13 = arith.constant 0 : index
    %17 = vector.load %arg6[%c0_12, %c0_13] : memref<128x128xf32, #tpu.memory_space<vmem>>, vector<128x128xf32>
    %cst_14 = arith.constant dense<0.000000e+00> : vector<128x128xf32>
    %18 = tpu.matmul %16, %17, %cst_14 {dimension_numbers = #tpu.dot_dimension_numbers<[1], [0], [0], [1], [0, 0, 1, 1], [], []>} : vector<128x128xf32>, vector<128x128xf32>, vector<128x128xf32> -> vector<128x128xf32>
    %c0_15 = arith.constant 0 : index
    %c0_16 = arith.constant 0 : index
    %19 = vector.load %arg7[%c0_15, %c0_16] : memref<1x128xf32, #tpu.memory_space<vmem>>, vector<1x128xf32>
    %20 = vector.broadcast %19 : vector<1x128xf32> to vector<128x128xf32>
    %21 = arith.addf %18, %20 : vector<128x128xf32>
    %22 = tpu.iota {dimensions = array<i32: 1>} : vector<128x128xi32>
    %c8_i32 = arith.constant 8 : i32
    %23 = vector.broadcast %c8_i32 : i32 to vector<128x128xi32>
    %24 = arith.cmpi sge, %22, %23 : vector<128x128xi32>
    %cst_17 = arith.constant -1.000000e+01 : f32
    %cst_18 = arith.constant 4.000000e+00 : f32
    %25 = vector.broadcast %cst_17 : f32 to vector<128x128xf32>
    %26 = arith.maximumf %25, %21 : vector<128x128xf32>
    %27 = vector.broadcast %cst_18 : f32 to vector<128x128xf32>
    %28 = arith.minimumf %27, %26 : vector<128x128xf32>
    %29 = arith.select %24, %28, %21 : vector<128x128xi1>, vector<128x128xf32>
    %c0_19 = arith.constant 0 : index
    %c0_20 = arith.constant 0 : index
    %30 = vector.load %arg8[%c0_19, %c0_20] : memref<128x128xf32, #tpu.memory_space<vmem>>, vector<128x128xf32>
    tpu.vector_store %arg8[%c0_19, %c0_20], %29 {strides = array<i32>} : memref<128x128xf32, #tpu.memory_space<vmem>>, vector<128x128xf32>,
    return
  }
  func.func @transform_0(%arg0: i32) -> (i32, i32) {
    %c0_i32 = arith.constant 0 : i32
    %c0_i32_0 = arith.constant 0 : i32
    return %arg0, %c0_i32 : i32, i32
  }
  func.func @transform_1(%arg0: i32) -> (i32, i32) {
    %c0_i32 = arith.constant 0 : i32
    %c0_i32_0 = arith.constant 0 : i32
    %c0_i32_1 = arith.constant 0 : i32
    return %c0_i32, %c0_i32_0 : i32, i32
  }
  func.func @transform_2(%arg0: i32) -> (i32, i32) {
    %c0_i32 = arith.constant 0 : i32
    %c0_i32_0 = arith.constant 0 : i32
    %c0_i32_1 = arith.constant 0 : i32
    return %c0_i32, %c0_i32_0 : i32, i32
  }
  func.func @transform_3(%arg0: i32) -> (i32, i32) {
    %c0_i32 = arith.constant 0 : i32
    %c0_i32_0 = arith.constant 0 : i32
    %c0_i32_1 = arith.constant 0 : i32
    return %c0_i32, %c0_i32_0 : i32, i32
  }
  func.func @transform_4(%arg0: i32) -> (i32, i32) {
    %c0_i32 = arith.constant 0 : i32
    %c0_i32_0 = arith.constant 0 : i32
    %c0_i32_1 = arith.constant 0 : i32
    return %c0_i32, %c0_i32_0 : i32, i32
  }
  func.func @transform_5(%arg0: i32) -> (i32, i32) {
    %c0_i32 = arith.constant 0 : i32
    %c0_i32_0 = arith.constant 0 : i32
    %c0_i32_1 = arith.constant 0 : i32
    return %c0_i32, %c0_i32_0 : i32, i32
  }
  func.func @transform_6(%arg0: i32) -> (i32, i32) {
    %c0_i32 = arith.constant 0 : i32
    %c0_i32_0 = arith.constant 0 : i32
    %c0_i32_1 = arith.constant 0 : i32
    return %c0_i32, %c0_i32_0 : i32, i32
  }
  func.func @transform_7(%arg0: i32) -> (i32, i32) {
    %c0_i32 = arith.constant 0 : i32
    %c0_i32_0 = arith.constant 0 : i32
    return %arg0, %c0_i32 : i32, i32
  }
}

</mosaic_0001>

<llo_original>
// kernel: tpu_custom_call.1
$region0: #{tpu_custom_call.1}
  #allocation0 [shape = 'u32[]', space=smem, size = 0x4, offset = 0x4, fixed_abs, tag = 'smem constant byte address 0x4 - core index']
  #allocation1 [shape = 'u32[144,128]{1,0:T(1,128)}', space=vmem, size = 0x12000, scoped, tag = 'internal scratch']
  %s0 = inlined_call_operand.vmem [shape: f32[128,784], index: 0, kind: input, shape index: {}]
  %s1 = inlined_call_operand.vmem [shape: f32[784,128], index: 1, kind: input, shape index: {}]
  %s2 = inlined_call_operand.vmem [shape: f32[1,128], index: 2, kind: input, shape index: {}]
  %s3 = inlined_call_operand.vmem [shape: f32[128,128], index: 3, kind: input, shape index: {}]
  %s4 = inlined_call_operand.vmem [shape: f32[1,128], index: 4, kind: input, shape index: {}]
  %s5 = inlined_call_operand.vmem [shape: f32[128,128], index: 5, kind: input, shape index: {}]
  %s6 = inlined_call_operand.vmem [shape: f32[1,128], index: 6, kind: input, shape index: {}]
  %s7 = inlined_call_operand.hbm [shape: f32[128,128], index: 7, kind: output, shape index: {}]
  %s8 = sld [smem:[#allocation0]]
  $region38: #{tpu_custom_call.1} parent=0
    _
  %s10 = ssub.s32 1, %s8
  %s11 = scalar_select 0, %s10, %s8
  $region1: #{tpu_custom_call.1} parent=0
    #allocation2 [shape = 'u8[65536]{0}', space=vmem, size = 0x10000, scoped, tag = 'output window, operand 0, single buffered']
    #allocation3 [shape = 's32[1]{0}', space=sflag, size = 0x4, scoped, tag = 'scoped memory for tpu_custom_call.1']
    %12 = vsyncpa [#allocation3], 0
    // Predicated region
    $region2: #{tpu_custom_call.1} parent=1 // pred_check
      _
    $region3: #{tpu_custom_call.1} parent=1 // pred_check_branch
      %14 = sbr.rel (0) target = $region5
    $region4: #{tpu_custom_call.1} parent=1 // pred_region
      _
    $region5: #{tpu_custom_call.1} parent=1 // pred_fallthru
      _
    // Predicated region
    $region6: #{tpu_custom_call.1} parent=1 // pred_check
      _
    $region7: #{tpu_custom_call.1} parent=1 // pred_check_branch
      %16 = sbr.rel (0) target = $region9
    $region8: #{tpu_custom_call.1} parent=1 // pred_region
      _
    $region9: #{tpu_custom_call.1} parent=1 // pred_fallthru
      _
    // Predicated region
    $region10: #{tpu_custom_call.1} parent=1 // pred_check
      _
    $region11: #{tpu_custom_call.1} parent=1 // pred_check_branch
      %18 = sbr.rel (0) target = $region13
    $region12: #{tpu_custom_call.1} parent=1 // pred_region
      _
    $region13: #{tpu_custom_call.1} parent=1 // pred_fallthru
      _
    // Predicated region
    $region14: #{tpu_custom_call.1} parent=1 // pred_check
      _
    $region15: #{tpu_custom_call.1} parent=1 // pred_check_branch
      %20 = sbr.rel (0) target = $region17
    $region16: #{tpu_custom_call.1} parent=1 // pred_region
      _
    $region17: #{tpu_custom_call.1} parent=1 // pred_fallthru
      _
    // Predicated region
    $region18: #{tpu_custom_call.1} parent=1 // pred_check
      _
    $region19: #{tpu_custom_call.1} parent=1 // pred_check_branch
      %22 = sbr.rel (0) target = $region21
    $region20: #{tpu_custom_call.1} parent=1 // pred_region
      _
    $region21: #{tpu_custom_call.1} parent=1 // pred_fallthru
      _
    // Predicated region
    $region22: #{tpu_custom_call.1} parent=1 // pred_check
      _
    $region23: #{tpu_custom_call.1} parent=1 // pred_check_branch
      %24 = sbr.rel (0) target = $region25
    $region24: #{tpu_custom_call.1} parent=1 // pred_region
      _
    $region25: #{tpu_custom_call.1} parent=1 // pred_fallthru
      _
    // Predicated region
    $region26: #{tpu_custom_call.1} parent=1 // pred_check
      _
    $region27: #{tpu_custom_call.1} parent=1 // pred_check_branch
      %26 = sbr.rel (0) target = $region29
    $region28: #{tpu_custom_call.1} parent=1 // pred_region
      _
    $region29: #{tpu_custom_call.1} parent=1 // pred_fallthru
      _
    %v27 = vld [vmem:[%s0] sm:$0xff]
    %v28 = vld [vmem:[%s0 + $0x8] sm:$0xff]
    %v29 = vld [vmem:[%s0 + $0x10] sm:$0xff]
    %v30 = vld [vmem:[%s0 + $0x18] sm:$0xff]
    %v31 = vld [vmem:[%s0 + $0x20] sm:$0xff]
    %v32 = vld [vmem:[%s0 + $0x28] sm:$0xff]
    %v33 = vld [vmem:[%s0 + $0x30] sm:$0xff]
    %v34 = vld [vmem:[%s0 + $0x38] sm:$0xff]
    %v35 = vld [vmem:[%s0 + $0x40] sm:$0xff]
    %v36 = vld [vmem:[%s0 + $0x48] sm:$0xff]
    %v37 = vld [vmem:[%s0 + $0x50] sm:$0xff]
    %v38 = vld [vmem:[%s0 + $0x58] sm:$0xff]
    %v39 = vld [vmem:[%s0 + $0x60] sm:$0xff]
    %v40 = vld [vmem:[%s0 + $0x68] sm:$0xff]
    %v41 = vld [vmem:[%s0 + $0x70] sm:$0xff]
    %v42 = vld [vmem:[%s0 + $0x78] sm:$0xff]
    %v43 = vld [vmem:[%s0 + $0x80] sm:$0xff]
    %v44 = vld [vmem:[%s0 + $0x88] sm:$0xff]
    %v45 = vld [vmem:[%s0 + $0x90] sm:$0xff]
    %v46 = vld [vmem:[%s0 + $0x98] sm:$0xff]
    %v47 = vld [vmem:[%s0 + $0xa0] sm:$0xff]
    %v48 = vld [vmem:[%s0 + $0xa8] sm:$0xff]
    %v49 = vld [vmem:[%s0 + $0xb0] sm:$0xff]
    %v50 = vld [vmem:[%s0 + $0xb8] sm:$0xff]
    %v51 = vld [vmem:[%s0 + $0xc0] sm:$0xff]
    %v52 = vld [vmem:[%s0 + $0xc8] sm:$0xff]
    %v53 = vld [vmem:[%s0 + $0xd0] sm:$0xff]
    %v54 = vld [vmem:[%s0 + $0xd8] sm:$0xff]
    %v55 = vld [vmem:[%s0 + $0xe0] sm:$0xff]
    %v56 = vld [vmem:[%s0 + $0xe8] sm:$0xff]
    %v57 = vld [vmem:[%s0 + $0xf0] sm:$0xff]
    %v58 = vld [vmem:[%s0 + $0xf8] sm:$0xff]
    %v59 = vld [vmem:[%s0 + $0x100] sm:$0xff]
    %v60 = vld [vmem:[%s0 + $0x108] sm:$0xff]
    %v61 = vld [vmem:[%s0 + $0x110] sm:$0xff]
    %v62 = vld [vmem:[%s0 + $0x118] sm:$0xff]
    %v63 = vld [vmem:[%s0 + $0x120] sm:$0xff]
    %v64 = vld [vmem:[%s0 + $0x128] sm:$0xff]
    %v65 = vld [vmem:[%s0 + $0x130] sm:$0xff]
    %v66 = vld [vmem:[%s0 + $0x138] sm:$0xff]
    %v67 = vld [vmem:[%s0 + $0x140] sm:$0xff]
    %v68 = vld [vmem:[%s0 + $0x148] sm:$0xff]
    %v69 = vld [vmem:[%s0 + $0x150] sm:$0xff]
    %v70 = vld [vmem:[%s0 + $0x158] sm:$0xff]
    %v71 = vld [vmem:[%s0 + $0x160] sm:$0xff]
    %v72 = vld [vmem:[%s0 + $0x168] sm:$0xff]
    %v73 = vld [vmem:[%s0 + $0x170] sm:$0xff]
    %v74 = vld [vmem:[%s0 + $0x178] sm:$0xff]
    %v75 = vld [vmem:[%s0 + $0x180] sm:$0xff]
    %v76 = vld [vmem:[%s0 + $0x188] sm:$0xff]
    %v77 = vld [vmem:[%s0 + $0x190] sm:$0xff]
    %v78 = vld [vmem:[%s0 + $0x198] sm:$0xff]
    %v79 = vld [vmem:[%s0 + $0x1a0] sm:$0xff]
    %v80 = vld [vmem:[%s0 + $0x1a8] sm:$0xff]
    %v81 = vld [vmem:[%s0 + $0x1b0] sm:$0xff]
    %v82 = vld [vmem:[%s0 + $0x1b8] sm:$0xff]
    %v83 = vld [vmem:[%s0 + $0x1c0] sm:$0xff]
    %v84 = vld [vmem:[%s0 + $0x1c8] sm:$0xff]
    %v85 = vld [vmem:[%s0 + $0x1d0] sm:$0xff]
    %v86 = vld [vmem:[%s0 + $0x1d8] sm:$0xff]
    %v87 = vld [vmem:[%s0 + $0x1e0] sm:$0xff]
    %v88 = vld [vmem:[%s0 + $0x1e8] sm:$0xff]
    %v89 = vld [vmem:[%s0 + $0x1f0] sm:$0xff]
    %v90 = vld [vmem:[%s0 + $0x1f8] sm:$0xff]
    %v91 = vld [vmem:[%s0 + $0x200] sm:$0xff]
    %v92 = vld [vmem:[%s0 + $0x208] sm:$0xff]
    %v93 = vld [vmem:[%s0 + $0x210] sm:$0xff]
    %v94 = vld [vmem:[%s0 + $0x218] sm:$0xff]
    %v95 = vld [vmem:[%s0 + $0x220] sm:$0xff]
    %v96 = vld [vmem:[%s0 + $0x228] sm:$0xff]
    %v97 = vld [vmem:[%s0 + $0x230] sm:$0xff]
    %v98 = vld [vmem:[%s0 + $0x238] sm:$0xff]
    %v99 = vld [vmem:[%s0 + $0x240] sm:$0xff]
    %v100 = vld [vmem:[%s0 + $0x248] sm:$0xff]
    %v101 = vld [vmem:[%s0 + $0x250] sm:$0xff]
    %v102 = vld [vmem:[%s0 + $0x258] sm:$0xff]
    %v103 = vld [vmem:[%s0 + $0x260] sm:$0xff]
    %v104 = vld [vmem:[%s0 + $0x268] sm:$0xff]
    %v105 = vld [vmem:[%s0 + $0x270] sm:$0xff]
    %v106 = vld [vmem:[%s0 + $0x278] sm:$0xff]
    %v107 = vld [vmem:[%s0 + $0x280] sm:$0xff]
    %v108 = vld [vmem:[%s0 + $0x288] sm:$0xff]
    %v109 = vld [vmem:[%s0 + $0x290] sm:$0xff]
    %v110 = vld [vmem:[%s0 + $0x298] sm:$0xff]
    %v111 = vld [vmem:[%s0 + $0x2a0] sm:$0xff]
    %v112 = vld [vmem:[%s0 + $0x2a8] sm:$0xff]
    %v113 = vld [vmem:[%s0 + $0x2b0] sm:$0xff]
    %v114 = vld [vmem:[%s0 + $0x2b8] sm:$0xff]
    %v115 = vld [vmem:[%s0 + $0x2c0] sm:$0xff]
    %v116 = vld [vmem:[%s0 + $0x2c8] sm:$0xff]
    %v117 = vld [vmem:[%s0 + $0x2d0] sm:$0xff]
    %v118 = vld [vmem:[%s0 + $0x2d8] sm:$0xff]
    %v119 = vld [vmem:[%s0 + $0x2e0] sm:$0xff]
    %v120 = vld [vmem:[%s0 + $0x2e8] sm:$0xff]
    %v121 = vld [vmem:[%s0 + $0x2f0] sm:$0xff]
    %v122 = vld [vmem:[%s0 + $0x2f8] sm:$0xff]
    %v123 = vld [vmem:[%s0 + $0x300] sm:$0xff]
    %v124 = vld [vmem:[%s0 + $0x308] sm:$0xff]
    %v125 = vld [vmem:[%s0 + $0x310] sm:$0xff]
    %v126 = vld [vmem:[%s0 + $0x318] sm:$0xff]
    %v127 = vld [vmem:[%s0 + $0x320] sm:$0xff]
    %v128 = vld [vmem:[%s0 + $0x328] sm:$0xff]
    %v129 = vld [vmem:[%s0 + $0x330] sm:$0xff]
    %v130 = vld [vmem:[%s0 + $0x338] sm:$0xff]
    %v131 = vld [vmem:[%s0 + $0x340] sm:$0xff]
    %v132 = vld [vmem:[%s0 + $0x348] sm:$0xff]
    %v133 = vld [vmem:[%s0 + $0x350] sm:$0xff]
    %v134 = vld [vmem:[%s0 + $0x358] sm:$0xff]
    %v135 = vld [vmem:[%s0 + $0x360] sm:$0xff]
    %v136 = vld [vmem:[%s0 + $0x368] sm:$0xff]
    %v137 = vld [vmem:[%s0 + $0x370] sm:$0xff]
    %v138 = vld [vmem:[%s0 + $0x378] sm:$0xff]
    %v139 = vld [vmem:[%s1] sm:$0xff]
    %v140 = vld [vmem:[%s1 + $0x8] sm:$0xff]
    %v141 = vld [vmem:[%s1 + $0x10] sm:$0xff]
    %v142 = vld [vmem:[%s1 + $0x18] sm:$0xff]
    %v143 = vld [vmem:[%s1 + $0x20] sm:$0xff]
    %v144 = vld [vmem:[%s1 + $0x28] sm:$0xff]
    %v145 = vld [vmem:[%s1 + $0x30] sm:$0xff]
    %v146 = vld [vmem:[%s1 + $0x38] sm:$0xff]
    %v147 = vld [vmem:[%s1 + $0x40] sm:$0xff]
    %v148 = vld [vmem:[%s1 + $0x48] sm:$0xff]
    %v149 = vld [vmem:[%s1 + $0x50] sm:$0xff]
    %v150 = vld [vmem:[%s1 + $0x58] sm:$0xff]
    %v151 = vld [vmem:[%s1 + $0x60] sm:$0xff]
    %v152 = vld [vmem:[%s1 + $0x68] sm:$0xff]
    %v153 = vld [vmem:[%s1 + $0x70] sm:$0xff]
    %v154 = vld [vmem:[%s1 + $0x78] sm:$0xff]
    %v155 = vld [vmem:[%s1 + $0x80] sm:$0xff]
    %v156 = vld [vmem:[%s1 + $0x88] sm:$0xff]
    %v157 = vld [vmem:[%s1 + $0x90] sm:$0xff]
    %v158 = vld [vmem:[%s1 + $0x98] sm:$0xff]
    %v159 = vld [vmem:[%s1 + $0xa0] sm:$0xff]
    %v160 = vld [vmem:[%s1 + $0xa8] sm:$0xff]
    %v161 = vld [vmem:[%s1 + $0xb0] sm:$0xff]
    %v162 = vld [vmem:[%s1 + $0xb8] sm:$0xff]
    %v163 = vld [vmem:[%s1 + $0xc0] sm:$0xff]
    %v164 = vld [vmem:[%s1 + $0xc8] sm:$0xff]
    %v165 = vld [vmem:[%s1 + $0xd0] sm:$0xff]
    %v166 = vld [vmem:[%s1 + $0xd8] sm:$0xff]
    %v167 = vld [vmem:[%s1 + $0xe0] sm:$0xff]
    %v168 = vld [vmem:[%s1 + $0xe8] sm:$0xff]
    %v169 = vld [vmem:[%s1 + $0xf0] sm:$0xff]
    %v170 = vld [vmem:[%s1 + $0xf8] sm:$0xff]
    %v171 = vld [vmem:[%s1 + $0x100] sm:$0xff]
    %v172 = vld [vmem:[%s1 + $0x108] sm:$0xff]
    %v173 = vld [vmem:[%s1 + $0x110] sm:$0xff]
    %v174 = vld [vmem:[%s1 + $0x118] sm:$0xff]
    %v175 = vld [vmem:[%s1 + $0x120] sm:$0xff]
    %v176 = vld [vmem:[%s1 + $0x128] sm:$0xff]
    %v177 = vld [vmem:[%s1 + $0x130] sm:$0xff]
    %v178 = vld [vmem:[%s1 + $0x138] sm:$0xff]
    %v179 = vld [vmem:[%s1 + $0x140] sm:$0xff]
    %v180 = vld [vmem:[%s1 + $0x148] sm:$0xff]
    %v181 = vld [vmem:[%s1 + $0x150] sm:$0xff]
    %v182 = vld [vmem:[%s1 + $0x158] sm:$0xff]
    %v183 = vld [vmem:[%s1 + $0x160] sm:$0xff]
    %v184 = vld [vmem:[%s1 + $0x168] sm:$0xff]
    %v185 = vld [vmem:[%s1 + $0x170] sm:$0xff]
    %v186 = vld [vmem:[%s1 + $0x178] sm:$0xff]
    %v187 = vld [vmem:[%s1 + $0x180] sm:$0xff]
    %v188 = vld [vmem:[%s1 + $0x188] sm:$0xff]
    %v189 = vld [vmem:[%s1 + $0x190] sm:$0xff]
    %v190 = vld [vmem:[%s1 + $0x198] sm:$0xff]
    %v191 = vld [vmem:[%s1 + $0x1a0] sm:$0xff]
    %v192 = vld [vmem:[%s1 + $0x1a8] sm:$0xff]
    %v193 = vld [vmem:[%s1 + $0x1b0] sm:$0xff]
    %v194 = vld [vmem:[%s1 + $0x1b8] sm:$0xff]
    %v195 = vld [vmem:[%s1 + $0x1c0] sm:$0xff]
    %v196 = vld [vmem:[%s1 + $0x1c8] sm:$0xff]
    %v197 = vld [vmem:[%s1 + $0x1d0] sm:$0xff]
    %v198 = vld [vmem:[%s1 + $0x1d8] sm:$0xff]
    %v199 = vld [vmem:[%s1 + $0x1e0] sm:$0xff]
    %v200 = vld [vmem:[%s1 + $0x1e8] sm:$0xff]
    %v201 = vld [vmem:[%s1 + $0x1f0] sm:$0xff]
    %v202 = vld [vmem:[%s1 + $0x1f8] sm:$0xff]
    %v203 = vld [vmem:[%s1 + $0x200] sm:$0xff]
    %v204 = vld [vmem:[%s1 + $0x208] sm:$0xff]
    %v205 = vld [vmem:[%s1 + $0x210] sm:$0xff]
    %v206 = vld [vmem:[%s1 + $0x218] sm:$0xff]
    %v207 = vld [vmem:[%s1 + $0x220] sm:$0xff]
    %v208 = vld [vmem:[%s1 + $0x228] sm:$0xff]
    %v209 = vld [vmem:[%s1 + $0x230] sm:$0xff]
    %v210 = vld [vmem:[%s1 + $0x238] sm:$0xff]
    %v211 = vld [vmem:[%s1 + $0x240] sm:$0xff]
    %v212 = vld [vmem:[%s1 + $0x248] sm:$0xff]
    %v213 = vld [vmem:[%s1 + $0x250] sm:$0xff]
    %v214 = vld [vmem:[%s1 + $0x258] sm:$0xff]
    %v215 = vld [vmem:[%s1 + $0x260] sm:$0xff]
    %v216 = vld [vmem:[%s1 + $0x268] sm:$0xff]
    %v217 = vld [vmem:[%s1 + $0x270] sm:$0xff]
    %v218 = vld [vmem:[%s1 + $0x278] sm:$0xff]
    %v219 = vld [vmem:[%s1 + $0x280] sm:$0xff]
    %v220 = vld [vmem:[%s1 + $0x288] sm:$0xff]
    %v221 = vld [vmem:[%s1 + $0x290] sm:$0xff]
    %v222 = vld [vmem:[%s1 + $0x298] sm:$0xff]
    %v223 = vld [vmem:[%s1 + $0x2a0] sm:$0xff]
    %v224 = vld [vmem:[%s1 + $0x2a8] sm:$0xff]
    %v225 = vld [vmem:[%s1 + $0x2b0] sm:$0xff]
    %v226 = vld [vmem:[%s1 + $0x2b8] sm:$0xff]
    %v227 = vld [vmem:[%s1 + $0x2c0] sm:$0xff]
    %v228 = vld [vmem:[%s1 + $0x2c8] sm:$0xff]
    %v229 = vld [vmem:[%s1 + $0x2d0] sm:$0xff]
    %v230 = vld [vmem:[%s1 + $0x2d8] sm:$0xff]
    %v231 = vld [vmem:[%s1 + $0x2e0] sm:$0xff]
    %v232 = vld [vmem:[%s1 + $0x2e8] sm:$0xff]
    %v233 = vld [vmem:[%s1 + $0x2f0] sm:$0xff]
    %v234 = vld [vmem:[%s1 + $0x2f8] sm:$0xff]
    %v235 = vld [vmem:[%s1 + $0x300] sm:$0xff]
    %v236 = vld [vmem:[%s1 + $0x308] sm:$0xff]
    %v237 = vld [vmem:[%s2] sm:$0x1]
    %v239 = vlaneseq
    %v240 = vshrl.u32 %v239, 7
    %v241 = vsub.s32 0, %v240
    %v242 = vrot.slane %v237, %v241
    %vm244 = vcmask 130048
    %v246 = vsel %vm244, %v33, 0
    %v249 = vsel %vm244, %v40, 0
    %v252 = vsel %vm244, %v47, 0
    %v255 = vsel %vm244, %v54, 0
    %v258 = vsel %vm244, %v61, 0
    %v261 = vsel %vm244, %v68, 0
    %v264 = vsel %vm244, %v75, 0
    %v267 = vsel %vm244, %v82, 0
    %v270 = vsel %vm244, %v89, 0
    %v273 = vsel %vm244, %v96, 0
    %v276 = vsel %vm244, %v103, 0
    %v279 = vsel %vm244, %v110, 0
    %v282 = vsel %vm244, %v117, 0
    %v285 = vsel %vm244, %v124, 0
    %v288 = vsel %vm244, %v131, 0
    %v291 = vsel %vm244, %v138, 0
    %293 = vmatprep.subr.mxu0 0.0
    %294 = vmatpush1.msra.mxu0 %v154
    %295 = vmatprep.subr.mxu0 0.0
    %296 = vmatpush1.msra.mxu0 %v153
    %297 = vmatprep.subr.mxu0 0.0
    %298 = vmatpush1.msra.mxu0 %v152
    %299 = vmatprep.subr.mxu0 0.0
    %300 = vmatpush1.msra.mxu0 %v151
    %301 = vmatprep.subr.mxu0 0.0
    %302 = vmatpush1.msra.mxu0 %v150
    %303 = vmatprep.subr.mxu0 0.0
    %304 = vmatpush1.msra.mxu0 %v149
    %305 = vmatprep.subr.mxu0 0.0
    %306 = vmatpush1.msra.mxu0 %v148
    %307 = vmatprep.subr.mxu0 0.0
    %308 = vmatpush1.msra.mxu0 %v147
    %309 = vmatprep.subr.mxu0 0.0
    %310 = vmatpush1.msra.mxu0 %v146
    %311 = vmatprep.subr.mxu0 0.0
    %312 = vmatpush1.msra.mxu0 %v145
    %313 = vmatprep.subr.mxu0 0.0
    %314 = vmatpush1.msra.mxu0 %v144
    %315 = vmatprep.subr.mxu0 0.0
    %316 = vmatpush1.msra.mxu0 %v143
    %317 = vmatprep.subr.mxu0 0.0
    %318 = vmatpush1.msra.mxu0 %v142
    %319 = vmatprep.subr.mxu0 0.0
    %320 = vmatpush1.msra.mxu0 %v141
    %321 = vmatprep.subr.mxu0 0.0
    %322 = vmatpush1.msra.mxu0 %v140
    %323 = vmatprep.subr.mxu0 0.0
    %324 = vmatpush1.msra.mxu0 %v139
    %325 = vmatprep.subr.mxu0 0.0
    %326 = vmatpush2.msra.mxu0 %v170
    %327 = vmatprep.subr.mxu0 0.0
    %328 = vmatpush2.msra.mxu0 %v169
    %329 = vmatprep.subr.mxu0 0.0
    %330 = vmatpush2.msra.mxu0 %v168
    %331 = vmatprep.subr.mxu0 0.0
    %332 = vmatpush2.msra.mxu0 %v167
    %333 = vmatprep.subr.mxu0 0.0
    %334 = vmatpush2.msra.mxu0 %v166
    %335 = vmatprep.subr.mxu0 0.0
    %336 = vmatpush2.msra.mxu0 %v165
    %337 = vmatprep.subr.mxu0 0.0
    %338 = vmatpush2.msra.mxu0 %v164
    %339 = vmatprep.subr.mxu0 0.0
    %340 = vmatpush2.msra.mxu0 %v163
    %341 = vmatprep.subr.mxu0 0.0
    %342 = vmatpush2.msra.mxu0 %v162
    %343 = vmatprep.subr.mxu0 0.0
    %344 = vmatpush2.msra.mxu0 %v161
    %345 = vmatprep.subr.mxu0 0.0
    %346 = vmatpush2.msra.mxu0 %v160
    %347 = vmatprep.subr.mxu0 0.0
    %348 = vmatpush2.msra.mxu0 %v159
    %349 = vmatprep.subr.mxu0 0.0
    %350 = vmatpush2.msra.mxu0 %v158
    %351 = vmatprep.subr.mxu0 0.0
    %352 = vmatpush2.msra.mxu0 %v157
    %353 = vmatprep.subr.mxu0 0.0
    %354 = vmatpush2.msra.mxu0 %v156
    %355 = vmatprep.subr.mxu0 0.0
    %356 = vmatpush2.msra.mxu0 %v155
    %357 = vmatprep.mubr.f32.mxu0 %v28
    %358 = vmatmul.mubr.f32.gmra.mxu0 %v27
    %v359 = vpop.f32.mrf.mxu0
    %v360 = vadd.f32 %v242, %v359
    %v361 = vpop.f32.mrf.mxu0
    %362 = vmatprep.mubr.f32.mxu0 %v35
    %363 = vmatmul.mubr.f32.gmra.mxu0 %v34
    %v364 = vpop.f32.mrf.mxu0
    %v365 = vadd.f32 %v242, %v364
    %v366 = vpop.f32.mrf.mxu0
    %367 = vmatprep.mubr.f32.mxu0 %v42
    %368 = vmatmul.mubr.f32.gmra.mxu0 %v41
    %v369 = vpop.f32.mrf.mxu0
    %v370 = vadd.f32 %v242, %v369
    %v371 = vpop.f32.mrf.mxu0
    %372 = vmatprep.mubr.f32.mxu0 %v49
    %373 = vmatmul.mubr.f32.gmra.mxu0 %v48
    %v374 = vpop.f32.mrf.mxu0
    %v375 = vadd.f32 %v242, %v374
    %v376 = vpop.f32.mrf.mxu0
    %377 = vmatprep.mubr.f32.mxu0 %v56
    %378 = vmatmul.mubr.f32.gmra.mxu0 %v55
    %v379 = vpop.f32.mrf.mxu0
    %v380 = vadd.f32 %v242, %v379
    %v381 = vpop.f32.mrf.mxu0
    %382 = vmatprep.mubr.f32.mxu0 %v63
    %383 = vmatmul.mubr.f32.gmra.mxu0 %v62
    %v384 = vpop.f32.mrf.mxu0
    %v385 = vadd.f32 %v242, %v384
    %v386 = vpop.f32.mrf.mxu0
    %387 = vmatprep.mubr.f32.mxu0 %v70
    %388 = vmatmul.mubr.f32.gmra.mxu0 %v69
    %v389 = vpop.f32.mrf.mxu0
    %v390 = vadd.f32 %v242, %v389
    %v391 = vpop.f32.mrf.mxu0
    %392 = vmatprep.mubr.f32.mxu0 %v77
    %393 = vmatmul.mubr.f32.gmra.mxu0 %v76
    %v394 = vpop.f32.mrf.mxu0
    %v395 = vadd.f32 %v242, %v394
    %v396 = vpop.f32.mrf.mxu0
    %397 = vmatprep.mubr.f32.mxu0 %v84
    %398 = vmatmul.mubr.f32.gmra.mxu0 %v83
    %v399 = vpop.f32.mrf.mxu0
    %v400 = vadd.f32 %v242, %v399
    %v401 = vpop.f32.mrf.mxu0
    %402 = vmatprep.mubr.f32.mxu0 %v91
    %403 = vmatmul.mubr.f32.gmra.mxu0 %v90
    %v404 = vpop.f32.mrf.mxu0
    %v405 = vadd.f32 %v242, %v404
    %v406 = vpop.f32.mrf.mxu0
    %407 = vmatprep.mubr.f32.mxu0 %v98
    %408 = vmatmul.mubr.f32.gmra.mxu0 %v97
    %v409 = vpop.f32.mrf.mxu0
    %v410 = vadd.f32 %v242, %v409
    %v411 = vpop.f32.mrf.mxu0
    %412 = vmatprep.mubr.f32.mxu0 %v105
    %413 = vmatmul.mubr.f32.gmra.mxu0 %v104
    %v414 = vpop.f32.mrf.mxu0
    %v415 = vadd.f32 %v242, %v414
    %v416 = vpop.f32.mrf.mxu0
    %417 = vmatprep.mubr.f32.mxu0 %v112
    %418 = vmatmul.mubr.f32.gmra.mxu0 %v111
    %v419 = vpop.f32.mrf.mxu0
    %v420 = vadd.f32 %v242, %v419
    %v421 = vpop.f32.mrf.mxu0
    %422 = vmatprep.mubr.f32.mxu0 %v119
    %423 = vmatmul.mubr.f32.gmra.mxu0 %v118
    %v424 = vpop.f32.mrf.mxu0
    %v425 = vadd.f32 %v242, %v424
    %v426 = vpop.f32.mrf.mxu0
    %427 = vmatprep.mubr.f32.mxu0 %v126
    %428 = vmatmul.mubr.f32.gmra.mxu0 %v125
    %v429 = vpop.f32.mrf.mxu0
    %v430 = vadd.f32 %v242, %v429
    %v431 = vpop.f32.mrf.mxu0
    %432 = vmatprep.mubr.f32.mxu0 %v133
    %433 = vmatmul.mubr.f32.gmra.mxu0 %v132
    %v434 = vpop.f32.mrf.mxu0
    %v435 = vadd.f32 %v242, %v434
    %v436 = vpop.f32.mrf.mxu0
    %437 = vdwg.mxu0
    %438 = vmatprep.subr.mxu0 0.0
    %439 = vmatpush1.msra.mxu0 %v186
    %440 = vmatprep.subr.mxu0 0.0
    %441 = vmatpush1.msra.mxu0 %v185
    %442 = vmatprep.subr.mxu0 0.0
    %443 = vmatpush1.msra.mxu0 %v184
    %444 = vmatprep.subr.mxu0 0.0
    %445 = vmatpush1.msra.mxu0 %v183
    %446 = vmatprep.subr.mxu0 0.0
    %447 = vmatpush1.msra.mxu0 %v182
    %448 = vmatprep.subr.mxu0 0.0
    %449 = vmatpush1.msra.mxu0 %v181
    %450 = vmatprep.subr.mxu0 0.0
    %451 = vmatpush1.msra.mxu0 %v180
    %452 = vmatprep.subr.mxu0 0.0
    %453 = vmatpush1.msra.mxu0 %v179
    %454 = vmatprep.subr.mxu0 0.0
    %455 = vmatpush1.msra.mxu0 %v178
    %456 = vmatprep.subr.mxu0 0.0
    %457 = vmatpush1.msra.mxu0 %v177
    %458 = vmatprep.subr.mxu0 0.0
    %459 = vmatpush1.msra.mxu0 %v176
    %460 = vmatprep.subr.mxu0 0.0
    %461 = vmatpush1.msra.mxu0 %v175
    %462 = vmatprep.subr.mxu0 0.0
    %463 = vmatpush1.msra.mxu0 %v174
    %464 = vmatprep.subr.mxu0 0.0
    %465 = vmatpush1.msra.mxu0 %v173
    %466 = vmatprep.subr.mxu0 0.0
    %467 = vmatpush1.msra.mxu0 %v172
    %468 = vmatprep.subr.mxu0 0.0
    %469 = vmatpush1.msra.mxu0 %v171
    %470 = vmatprep.subr.mxu0 0.0
    %471 = vmatpush2.msra.mxu0 %v202
    %472 = vmatprep.subr.mxu0 0.0
    %473 = vmatpush2.msra.mxu0 %v201
    %474 = vmatprep.subr.mxu0 0.0
    %475 = vmatpush2.msra.mxu0 %v200
    %476 = vmatprep.subr.mxu0 0.0
    %477 = vmatpush2.msra.mxu0 %v199
    %478 = vmatprep.subr.mxu0 0.0
    %479 = vmatpush2.msra.mxu0 %v198
    %480 = vmatprep.subr.mxu0 0.0
    %481 = vmatpush2.msra.mxu0 %v197
    %482 = vmatprep.subr.mxu0 0.0
    %483 = vmatpush2.msra.mxu0 %v196
    %484 = vmatprep.subr.mxu0 0.0
    %485 = vmatpush2.msra.mxu0 %v195
    %486 = vmatprep.subr.mxu0 0.0
    %487 = vmatpush2.msra.mxu0 %v194
    %488 = vmatprep.subr.mxu0 0.0
    %489 = vmatpush2.msra.mxu0 %v193
    %490 = vmatprep.subr.mxu0 0.0
    %491 = vmatpush2.msra.mxu0 %v192
    %492 = vmatprep.subr.mxu0 0.0
    %493 = vmatpush2.msra.mxu0 %v191
    %494 = vmatprep.subr.mxu0 0.0
    %495 = vmatpush2.msra.mxu0 %v190
    %496 = vmatprep.subr.mxu0 0.0
    %497 = vmatpush2.msra.mxu0 %v189
    %498 = vmatprep.subr.mxu0 0.0
    %499 = vmatpush2.msra.mxu0 %v188
    %500 = vmatprep.subr.mxu0 0.0
    %501 = vmatpush2.msra.mxu0 %v187
    %502 = vmatprep.mubr.f32.mxu0 %v30
    %503 = vmatmul.mubr.f32.gmra.mxu0 %v29
    %v504 = vpop.f32.mrf.mxu0
    %v505 = vadd.f32 %v360, %v504
    %v506 = vpop.f32.mrf.mxu0
    %507 = vmatprep.mubr.f32.mxu0 %v37
    %508 = vmatmul.mubr.f32.gmra.mxu0 %v36
    %v509 = vpop.f32.mrf.mxu0
    %v510 = vadd.f32 %v365, %v509
    %v511 = vpop.f32.mrf.mxu0
    %512 = vmatprep.mubr.f32.mxu0 %v44
    %513 = vmatmul.mubr.f32.gmra.mxu0 %v43
    %v514 = vpop.f32.mrf.mxu0
    %v515 = vadd.f32 %v370, %v514
    %v516 = vpop.f32.mrf.mxu0
    %517 = vmatprep.mubr.f32.mxu0 %v51
    %518 = vmatmul.mubr.f32.gmra.mxu0 %v50
    %v519 = vpop.f32.mrf.mxu0
    %v520 = vadd.f32 %v375, %v519
    %v521 = vpop.f32.mrf.mxu0
    %522 = vmatprep.mubr.f32.mxu0 %v58
    %523 = vmatmul.mubr.f32.gmra.mxu0 %v57
    %v524 = vpop.f32.mrf.mxu0
    %v525 = vadd.f32 %v380, %v524
    %v526 = vpop.f32.mrf.mxu0
    %527 = vmatprep.mubr.f32.mxu0 %v65
    %528 = vmatmul.mubr.f32.gmra.mxu0 %v64
    %v529 = vpop.f32.mrf.mxu0
    %v530 = vadd.f32 %v385, %v529
    %v531 = vpop.f32.mrf.mxu0
    %532 = vmatprep.mubr.f32.mxu0 %v72
    %533 = vmatmul.mubr.f32.gmra.mxu0 %v71
    %v534 = vpop.f32.mrf.mxu0
    %v535 = vadd.f32 %v390, %v534
    %v536 = vpop.f32.mrf.mxu0
    %537 = vmatprep.mubr.f32.mxu0 %v79
    %538 = vmatmul.mubr.f32.gmra.mxu0 %v78
    %v539 = vpop.f32.mrf.mxu0
    %v540 = vadd.f32 %v395, %v539
    %v541 = vpop.f32.mrf.mxu0
    %542 = vmatprep.mubr.f32.mxu0 %v86
    %543 = vmatmul.mubr.f32.gmra.mxu0 %v85
    %v544 = vpop.f32.mrf.mxu0
    %v545 = vadd.f32 %v400, %v544
    %v546 = vpop.f32.mrf.mxu0
    %547 = vmatprep.mubr.f32.mxu0 %v93
    %548 = vmatmul.mubr.f32.gmra.mxu0 %v92
    %v549 = vpop.f32.mrf.mxu0
    %v550 = vadd.f32 %v405, %v549
    %v551 = vpop.f32.mrf.mxu0
    %552 = vmatprep.mubr.f32.mxu0 %v100
    %553 = vmatmul.mubr.f32.gmra.mxu0 %v99
    %v554 = vpop.f32.mrf.mxu0
    %v555 = vadd.f32 %v410, %v554
    %v556 = vpop.f32.mrf.mxu0
    %557 = vmatprep.mubr.f32.mxu0 %v107
    %558 = vmatmul.mubr.f32.gmra.mxu0 %v106
    %v559 = vpop.f32.mrf.mxu0
    %v560 = vadd.f32 %v415, %v559
    %v561 = vpop.f32.mrf.mxu0
    %562 = vmatprep.mubr.f32.mxu0 %v114
    %563 = vmatmul.mubr.f32.gmra.mxu0 %v113
    %v564 = vpop.f32.mrf.mxu0
    %v565 = vadd.f32 %v420, %v564
    %v566 = vpop.f32.mrf.mxu0
    %567 = vmatprep.mubr.f32.mxu0 %v121
    %568 = vmatmul.mubr.f32.gmra.mxu0 %v120
    %v569 = vpop.f32.mrf.mxu0
    %v570 = vadd.f32 %v425, %v569
    %v571 = vpop.f32.mrf.mxu0
    %572 = vmatprep.mubr.f32.mxu0 %v128
    %573 = vmatmul.mubr.f32.gmra.mxu0 %v127
    %v574 = vpop.f32.mrf.mxu0
    %v575 = vadd.f32 %v430, %v574
    %v576 = vpop.f32.mrf.mxu0
    %577 = vmatprep.mubr.f32.mxu0 %v135
    %578 = vmatmul.mubr.f32.gmra.mxu0 %v134
    %v579 = vpop.f32.mrf.mxu0
    %v580 = vadd.f32 %v435, %v579
    %v581 = vpop.f32.mrf.mxu0
    %582 = vdwg.mxu0
    %583 = vmatprep.subr.mxu0 0.0
    %584 = vmatpush1.msra.mxu0 %v218
    %585 = vmatprep.subr.mxu0 0.0
    %586 = vmatpush1.msra.mxu0 %v217
    %587 = vmatprep.subr.mxu0 0.0
    %588 = vmatpush1.msra.mxu0 %v216
    %589 = vmatprep.subr.mxu0 0.0
    %590 = vmatpush1.msra.mxu0 %v215
    %591 = vmatprep.subr.mxu0 0.0
    %592 = vmatpush1.msra.mxu0 %v214
    %593 = vmatprep.subr.mxu0 0.0
    %594 = vmatpush1.msra.mxu0 %v213
    %595 = vmatprep.subr.mxu0 0.0
    %596 = vmatpush1.msra.mxu0 %v212
    %597 = vmatprep.subr.mxu0 0.0
    %598 = vmatpush1.msra.mxu0 %v211
    %599 = vmatprep.subr.mxu0 0.0
    %600 = vmatpush1.msra.mxu0 %v210
    %601 = vmatprep.subr.mxu0 0.0
    %602 = vmatpush1.msra.mxu0 %v209
    %603 = vmatprep.subr.mxu0 0.0
    %604 = vmatpush1.msra.mxu0 %v208
    %605 = vmatprep.subr.mxu0 0.0
    %606 = vmatpush1.msra.mxu0 %v207
    %607 = vmatprep.subr.mxu0 0.0
    %608 = vmatpush1.msra.mxu0 %v206
    %609 = vmatprep.subr.mxu0 0.0
    %610 = vmatpush1.msra.mxu0 %v205
    %611 = vmatprep.subr.mxu0 0.0
    %612 = vmatpush1.msra.mxu0 %v204
    %613 = vmatprep.subr.mxu0 0.0
    %614 = vmatpush1.msra.mxu0 %v203
    %615 = vmatprep.subr.mxu0 0.0
    %616 = vmatpush2.msra.mxu0 %v234
    %617 = vmatprep.subr.mxu0 0.0
    %618 = vmatpush2.msra.mxu0 %v233
    %619 = vmatprep.subr.mxu0 0.0
    %620 = vmatpush2.msra.mxu0 %v232
    %621 = vmatprep.subr.mxu0 0.0
    %622 = vmatpush2.msra.mxu0 %v231
    %623 = vmatprep.subr.mxu0 0.0
    %624 = vmatpush2.msra.mxu0 %v230
    %625 = vmatprep.subr.mxu0 0.0
    %626 = vmatpush2.msra.mxu0 %v229
    %627 = vmatprep.subr.mxu0 0.0
    %628 = vmatpush2.msra.mxu0 %v228
    %629 = vmatprep.subr.mxu0 0.0
    %630 = vmatpush2.msra.mxu0 %v227
    %631 = vmatprep.subr.mxu0 0.0
    %632 = vmatpush2.msra.mxu0 %v226
    %633 = vmatprep.subr.mxu0 0.0
    %634 = vmatpush2.msra.mxu0 %v225
    %635 = vmatprep.subr.mxu0 0.0
    %636 = vmatpush2.msra.mxu0 %v224
    %637 = vmatprep.subr.mxu0 0.0
    %638 = vmatpush2.msra.mxu0 %v223
    %639 = vmatprep.subr.mxu0 0.0
    %640 = vmatpush2.msra.mxu0 %v222
    %641 = vmatprep.subr.mxu0 0.0
    %642 = vmatpush2.msra.mxu0 %v221
    %643 = vmatprep.subr.mxu0 0.0
    %644 = vmatpush2.msra.mxu0 %v220
    %645 = vmatprep.subr.mxu0 0.0
    %646 = vmatpush2.msra.mxu0 %v219
    %647 = vmatprep.mubr.f32.mxu0 %v32
    %648 = vmatmul.mubr.f32.gmra.mxu0 %v31
    %v649 = vpop.f32.mrf.mxu0
    %v650 = vadd.f32 %v505, %v649
    %v651 = vpop.f32.mrf.mxu0
    %652 = vmatprep.mubr.f32.mxu0 %v39
    %653 = vmatmul.mubr.f32.gmra.mxu0 %v38
    %v654 = vpop.f32.mrf.mxu0
    %v655 = vadd.f32 %v510, %v654
    %v656 = vpop.f32.mrf.mxu0
    %657 = vmatprep.mubr.f32.mxu0 %v46
    %658 = vmatmul.mubr.f32.gmra.mxu0 %v45
    %v659 = vpop.f32.mrf.mxu0
    %v660 = vadd.f32 %v515, %v659
    %v661 = vpop.f32.mrf.mxu0
    %662 = vmatprep.mubr.f32.mxu0 %v53
    %663 = vmatmul.mubr.f32.gmra.mxu0 %v52
    %v664 = vpop.f32.mrf.mxu0
    %v665 = vadd.f32 %v520, %v664
    %v666 = vpop.f32.mrf.mxu0
    %667 = vmatprep.mubr.f32.mxu0 %v60
    %668 = vmatmul.mubr.f32.gmra.mxu0 %v59
    %v669 = vpop.f32.mrf.mxu0
    %v670 = vadd.f32 %v525, %v669
    %v671 = vpop.f32.mrf.mxu0
    %672 = vmatprep.mubr.f32.mxu0 %v67
    %673 = vmatmul.mubr.f32.gmra.mxu0 %v66
    %v674 = vpop.f32.mrf.mxu0
    %v675 = vadd.f32 %v530, %v674
    %v676 = vpop.f32.mrf.mxu0
    %677 = vmatprep.mubr.f32.mxu0 %v74
    %678 = vmatmul.mubr.f32.gmra.mxu0 %v73
    %v679 = vpop.f32.mrf.mxu0
    %v680 = vadd.f32 %v535, %v679
    %v681 = vpop.f32.mrf.mxu0
    %682 = vmatprep.mubr.f32.mxu0 %v81
    %683 = vmatmul.mubr.f32.gmra.mxu0 %v80
    %v684 = vpop.f32.mrf.mxu0
    %v685 = vadd.f32 %v540, %v684
    %v686 = vpop.f32.mrf.mxu0
    %687 = vmatprep.mubr.f32.mxu0 %v88
    %688 = vmatmul.mubr.f32.gmra.mxu0 %v87
    %v689 = vpop.f32.mrf.mxu0
    %v690 = vadd.f32 %v545, %v689
    %v691 = vpop.f32.mrf.mxu0
    %692 = vmatprep.mubr.f32.mxu0 %v95
    %693 = vmatmul.mubr.f32.gmra.mxu0 %v94
    %v694 = vpop.f32.mrf.mxu0
    %v695 = vadd.f32 %v550, %v694
    %v696 = vpop.f32.mrf.mxu0
    %697 = vmatprep.mubr.f32.mxu0 %v102
    %698 = vmatmul.mubr.f32.gmra.mxu0 %v101
    %v699 = vpop.f32.mrf.mxu0
    %v700 = vadd.f32 %v555, %v699
    %v701 = vpop.f32.mrf.mxu0
    %702 = vmatprep.mubr.f32.mxu0 %v109
    %703 = vmatmul.mubr.f32.gmra.mxu0 %v108
    %v704 = vpop.f32.mrf.mxu0
    %v705 = vadd.f32 %v560, %v704
    %v706 = vpop.f32.mrf.mxu0
    %707 = vmatprep.mubr.f32.mxu0 %v116
    %708 = vmatmul.mubr.f32.gmra.mxu0 %v115
    %v709 = vpop.f32.mrf.mxu0
    %v710 = vadd.f32 %v565, %v709
    %v711 = vpop.f32.mrf.mxu0
    %712 = vmatprep.mubr.f32.mxu0 %v123
    %713 = vmatmul.mubr.f32.gmra.mxu0 %v122
    %v714 = vpop.f32.mrf.mxu0
    %v715 = vadd.f32 %v570, %v714
    %v716 = vpop.f32.mrf.mxu0
    %717 = vmatprep.mubr.f32.mxu0 %v130
    %718 = vmatmul.mubr.f32.gmra.mxu0 %v129
    %v719 = vpop.f32.mrf.mxu0
    %v720 = vadd.f32 %v575, %v719
    %v721 = vpop.f32.mrf.mxu0
    %722 = vmatprep.mubr.f32.mxu0 %v137
    %723 = vmatmul.mubr.f32.gmra.mxu0 %v136
    %v724 = vpop.f32.mrf.mxu0
    %v725 = vadd.f32 %v580, %v724
    %v726 = vpop.f32.mrf.mxu0
    %727 = vdwg.mxu0
    %728 = vmatprep.subr.mxu0 0.0
    %729 = vmatpush1.msra.mxu0 0.0
    %730 = vmatprep.subr.mxu0 0.0
    %731 = vmatpush1.msra.mxu0 0.0
    %732 = vmatprep.subr.mxu0 0.0
    %733 = vmatpush1.msra.mxu0 0.0
    %734 = vmatprep.subr.mxu0 0.0
    %735 = vmatpush1.msra.mxu0 0.0
    %736 = vmatprep.subr.mxu0 0.0
    %737 = vmatpush1.msra.mxu0 0.0
    %738 = vmatprep.subr.mxu0 0.0
    %739 = vmatpush1.msra.mxu0 0.0
    %740 = vmatprep.subr.mxu0 0.0
    %741 = vmatpush1.msra.mxu0 0.0
    %742 = vmatprep.subr.mxu0 0.0
    %743 = vmatpush1.msra.mxu0 0.0
    %744 = vmatprep.subr.mxu0 0.0
    %745 = vmatpush1.msra.mxu0 0.0
    %746 = vmatprep.subr.mxu0 0.0
    %747 = vmatpush1.msra.mxu0 0.0
    %748 = vmatprep.subr.mxu0 0.0
    %749 = vmatpush1.msra.mxu0 0.0
    %750 = vmatprep.subr.mxu0 0.0
    %751 = vmatpush1.msra.mxu0 0.0
    %752 = vmatprep.subr.mxu0 0.0
    %753 = vmatpush1.msra.mxu0 0.0
    %754 = vmatprep.subr.mxu0 0.0
    %755 = vmatpush1.msra.mxu0 0.0
    %756 = vmatprep.subr.mxu0 0.0
    %757 = vmatpush1.msra.mxu0 %v236
    %758 = vmatprep.subr.mxu0 0.0
    %759 = vmatpush1.msra.mxu0 %v235
    %760 = vmatprep.subr.mxu0 0.0
    %761 = vmatpush2.msra.mxu0 0.0
    %762 = vmatprep.subr.mxu0 0.0
    %763 = vmatpush2.msra.mxu0 0.0
    %764 = vmatprep.subr.mxu0 0.0
    %765 = vmatpush2.msra.mxu0 0.0
    %766 = vmatprep.subr.mxu0 0.0
    %767 = vmatpush2.msra.mxu0 0.0
    %768 = vmatprep.subr.mxu0 0.0
    %769 = vmatpush2.msra.mxu0 0.0
    %770 = vmatprep.subr.mxu0 0.0
    %771 = vmatpush2.msra.mxu0 0.0
    %772 = vmatprep.subr.mxu0 0.0
    %773 = vmatpush2.msra.mxu0 0.0
    %774 = vmatprep.subr.mxu0 0.0
    %775 = vmatpush2.msra.mxu0 0.0
    %776 = vmatprep.subr.mxu0 0.0
    %777 = vmatpush2.msra.mxu0 0.0
    %778 = vmatprep.subr.mxu0 0.0
    %779 = vmatpush2.msra.mxu0 0.0
    %780 = vmatprep.subr.mxu0 0.0
    %781 = vmatpush2.msra.mxu0 0.0
    %782 = vmatprep.subr.mxu0 0.0
    %783 = vmatpush2.msra.mxu0 0.0
    %784 = vmatprep.subr.mxu0 0.0
    %785 = vmatpush2.msra.mxu0 0.0
    %786 = vmatprep.subr.mxu0 0.0
    %787 = vmatpush2.msra.mxu0 0.0
    %788 = vmatprep.subr.mxu0 0.0
    %789 = vmatpush2.msra.mxu0 0.0
    %790 = vmatprep.subr.mxu0 0.0
    %791 = vmatpush2.msra.mxu0 0.0
    %792 = vmatprep.mubr.f32.mxu0 0.0
    %793 = vmatmul.mubr.f32.gmra.mxu0 %v246
    %v794 = vpop.f32.mrf.mxu0
    %v795 = vadd.f32 %v650, %v794
    %v796 = vpop.f32.mrf.mxu0
    %797 = vmatprep.mubr.f32.mxu0 0.0
    %798 = vmatmul.mubr.f32.gmra.mxu0 %v249
    %v799 = vpop.f32.mrf.mxu0
    %v800 = vadd.f32 %v655, %v799
    %v801 = vpop.f32.mrf.mxu0
    %802 = vmatprep.mubr.f32.mxu0 0.0
    %803 = vmatmul.mubr.f32.gmra.mxu0 %v252
    %v804 = vpop.f32.mrf.mxu0
    %v805 = vadd.f32 %v660, %v804
    %v806 = vpop.f32.mrf.mxu0
    %807 = vmatprep.mubr.f32.mxu0 0.0
    %808 = vmatmul.mubr.f32.gmra.mxu0 %v255
    %v809 = vpop.f32.mrf.mxu0
    %v810 = vadd.f32 %v665, %v809
    %v811 = vpop.f32.mrf.mxu0
    %812 = vmatprep.mubr.f32.mxu0 0.0
    %813 = vmatmul.mubr.f32.gmra.mxu0 %v258
    %v814 = vpop.f32.mrf.mxu0
    %v815 = vadd.f32 %v670, %v814
    %v816 = vpop.f32.mrf.mxu0
    %817 = vmatprep.mubr.f32.mxu0 0.0
    %818 = vmatmul.mubr.f32.gmra.mxu0 %v261
    %v819 = vpop.f32.mrf.mxu0
    %v820 = vadd.f32 %v675, %v819
    %v821 = vpop.f32.mrf.mxu0
    %822 = vmatprep.mubr.f32.mxu0 0.0
    %823 = vmatmul.mubr.f32.gmra.mxu0 %v264
    %v824 = vpop.f32.mrf.mxu0
    %v825 = vadd.f32 %v680, %v824
    %v826 = vpop.f32.mrf.mxu0
    %827 = vmatprep.mubr.f32.mxu0 0.0
    %828 = vmatmul.mubr.f32.gmra.mxu0 %v267
    %v829 = vpop.f32.mrf.mxu0
    %v830 = vadd.f32 %v685, %v829
    %v831 = vpop.f32.mrf.mxu0
    %832 = vmatprep.mubr.f32.mxu0 0.0
    %833 = vmatmul.mubr.f32.gmra.mxu0 %v270
    %v834 = vpop.f32.mrf.mxu0
    %v835 = vadd.f32 %v690, %v834
    %v836 = vpop.f32.mrf.mxu0
    %837 = vmatprep.mubr.f32.mxu0 0.0
    %838 = vmatmul.mubr.f32.gmra.mxu0 %v273
    %v839 = vpop.f32.mrf.mxu0
    %v840 = vadd.f32 %v695, %v839
    %v841 = vpop.f32.mrf.mxu0
    %842 = vmatprep.mubr.f32.mxu0 0.0
    %843 = vmatmul.mubr.f32.gmra.mxu0 %v276
    %v844 = vpop.f32.mrf.mxu0
    %v845 = vadd.f32 %v700, %v844
    %v846 = vpop.f32.mrf.mxu0
    %847 = vmatprep.mubr.f32.mxu0 0.0
    %848 = vmatmul.mubr.f32.gmra.mxu0 %v279
    %v849 = vpop.f32.mrf.mxu0
    %v850 = vadd.f32 %v705, %v849
    %v851 = vpop.f32.mrf.mxu0
    %852 = vmatprep.mubr.f32.mxu0 0.0
    %853 = vmatmul.mubr.f32.gmra.mxu0 %v282
    %v854 = vpop.f32.mrf.mxu0
    %v855 = vadd.f32 %v710, %v854
    %v856 = vpop.f32.mrf.mxu0
    %857 = vmatprep.mubr.f32.mxu0 0.0
    %858 = vmatmul.mubr.f32.gmra.mxu0 %v285
    %v859 = vpop.f32.mrf.mxu0
    %v860 = vadd.f32 %v715, %v859
    %v861 = vpop.f32.mrf.mxu0
    %862 = vmatprep.mubr.f32.mxu0 0.0
    %863 = vmatmul.mubr.f32.gmra.mxu0 %v288
    %v864 = vpop.f32.mrf.mxu0
    %v865 = vadd.f32 %v720, %v864
    %v866 = vpop.f32.mrf.mxu0
    %867 = vmatprep.mubr.f32.mxu0 0.0
    %868 = vmatmul.mubr.f32.gmra.mxu0 %v291
    %v869 = vpop.f32.mrf.mxu0
    %v870 = vadd.f32 %v725, %v869
    %v871 = vpop.f32.mrf.mxu0
    %872 = vdwg.mxu0
    %v873 = vmul.f32 %v795, 0.01
    %v874 = vmul.f32 %v800, 0.01
    %v875 = vmul.f32 %v805, 0.01
    %v876 = vmul.f32 %v810, 0.01
    %v877 = vmul.f32 %v815, 0.01
    %v878 = vmul.f32 %v820, 0.01
    %v879 = vmul.f32 %v825, 0.01
    %v880 = vmul.f32 %v830, 0.01
    %v881 = vmul.f32 %v835, 0.01
    %v882 = vmul.f32 %v840, 0.01
    %v883 = vmul.f32 %v845, 0.01
    %v884 = vmul.f32 %v850, 0.01
    %v885 = vmul.f32 %v855, 0.01
    %v886 = vmul.f32 %v860, 0.01
    %v887 = vmul.f32 %v865, 0.01
    %v888 = vmul.f32 %v870, 0.01
    %v889 = vmax.f32 %v795, %v873
    %v890 = vmax.f32 %v800, %v874
    %v891 = vmax.f32 %v805, %v875
    %v892 = vmax.f32 %v810, %v876
    %v893 = vmax.f32 %v815, %v877
    %v894 = vmax.f32 %v820, %v878
    %v895 = vmax.f32 %v825, %v879
    %v896 = vmax.f32 %v830, %v880
    %v897 = vmax.f32 %v835, %v881
    %v898 = vmax.f32 %v840, %v882
    %v899 = vmax.f32 %v845, %v883
    %v900 = vmax.f32 %v850, %v884
    %v901 = vmax.f32 %v855, %v885
    %v902 = vmax.f32 %v860, %v886
    %v903 = vmax.f32 %v865, %v887
    %v904 = vmax.f32 %v870, %v888
    %v905 = vld [vmem:[%s3] sm:$0xff]
    %v906 = vld [vmem:[%s3 + $0x8] sm:$0xff]
    %v907 = vld [vmem:[%s3 + $0x10] sm:$0xff]
    %v908 = vld [vmem:[%s3 + $0x18] sm:$0xff]
    %v909 = vld [vmem:[%s3 + $0x20] sm:$0xff]
    %v910 = vld [vmem:[%s3 + $0x28] sm:$0xff]
    %v911 = vld [vmem:[%s3 + $0x30] sm:$0xff]
    %v912 = vld [vmem:[%s3 + $0x38] sm:$0xff]
    %v913 = vld [vmem:[%s3 + $0x40] sm:$0xff]
    %v914 = vld [vmem:[%s3 + $0x48] sm:$0xff]
    %v915 = vld [vmem:[%s3 + $0x50] sm:$0xff]
    %v916 = vld [vmem:[%s3 + $0x58] sm:$0xff]
    %v917 = vld [vmem:[%s3 + $0x60] sm:$0xff]
    %v918 = vld [vmem:[%s3 + $0x68] sm:$0xff]
    %v919 = vld [vmem:[%s3 + $0x70] sm:$0xff]
    %v920 = vld [vmem:[%s3 + $0x78] sm:$0xff]
    %v921 = vld [vmem:[%s4] sm:$0x1]
    %v923 = vlaneseq
    %v924 = vshrl.u32 %v923, 7
    %v925 = vsub.s32 0, %v924
    %v926 = vrot.slane %v921, %v925
    %928 = vmatprep.subr.mxu0 0.0
    %929 = vmatpush1.msra.mxu0 %v920
    %930 = vmatprep.subr.mxu0 0.0
    %931 = vmatpush1.msra.mxu0 %v919
    %932 = vmatprep.subr.mxu0 0.0
    %933 = vmatpush1.msra.mxu0 %v918
    %934 = vmatprep.subr.mxu0 0.0
    %935 = vmatpush1.msra.mxu0 %v917
    %936 = vmatprep.subr.mxu0 0.0
    %937 = vmatpush1.msra.mxu0 %v916
    %938 = vmatprep.subr.mxu0 0.0
    %939 = vmatpush1.msra.mxu0 %v915
    %940 = vmatprep.subr.mxu0 0.0
    %941 = vmatpush1.msra.mxu0 %v914
    %942 = vmatprep.subr.mxu0 0.0
    %943 = vmatpush1.msra.mxu0 %v913
    %944 = vmatprep.subr.mxu0 0.0
    %945 = vmatpush1.msra.mxu0 %v912
    %946 = vmatprep.subr.mxu0 0.0
    %947 = vmatpush1.msra.mxu0 %v911
    %948 = vmatprep.subr.mxu0 0.0
    %949 = vmatpush1.msra.mxu0 %v910
    %950 = vmatprep.subr.mxu0 0.0
    %951 = vmatpush1.msra.mxu0 %v909
    %952 = vmatprep.subr.mxu0 0.0
    %953 = vmatpush1.msra.mxu0 %v908
    %954 = vmatprep.subr.mxu0 0.0
    %955 = vmatpush1.msra.mxu0 %v907
    %956 = vmatprep.subr.mxu0 0.0
    %957 = vmatpush1.msra.mxu0 %v906
    %958 = vmatprep.subr.mxu0 0.0
    %959 = vmatpush1.msra.mxu0 %v905
    %960 = vmatprep.subr.mxu0 0.0
    %961 = vmatpush2.msra.mxu0 0.0
    %962 = vmatprep.subr.mxu0 0.0
    %963 = vmatpush2.msra.mxu0 0.0
    %964 = vmatprep.subr.mxu0 0.0
    %965 = vmatpush2.msra.mxu0 0.0
    %966 = vmatprep.subr.mxu0 0.0
    %967 = vmatpush2.msra.mxu0 0.0
    %968 = vmatprep.subr.mxu0 0.0
    %969 = vmatpush2.msra.mxu0 0.0
    %970 = vmatprep.subr.mxu0 0.0
    %971 = vmatpush2.msra.mxu0 0.0
    %972 = vmatprep.subr.mxu0 0.0
    %973 = vmatpush2.msra.mxu0 0.0
    %974 = vmatprep.subr.mxu0 0.0
    %975 = vmatpush2.msra.mxu0 0.0
    %976 = vmatprep.subr.mxu0 0.0
    %977 = vmatpush2.msra.mxu0 0.0
    %978 = vmatprep.subr.mxu0 0.0
    %979 = vmatpush2.msra.mxu0 0.0
    %980 = vmatprep.subr.mxu0 0.0
    %981 = vmatpush2.msra.mxu0 0.0
    %982 = vmatprep.subr.mxu0 0.0
    %983 = vmatpush2.msra.mxu0 0.0
    %984 = vmatprep.subr.mxu0 0.0
    %985 = vmatpush2.msra.mxu0 0.0
    %986 = vmatprep.subr.mxu0 0.0
    %987 = vmatpush2.msra.mxu0 0.0
    %988 = vmatprep.subr.mxu0 0.0
    %989 = vmatpush2.msra.mxu0 0.0
    %990 = vmatprep.subr.mxu0 0.0
    %991 = vmatpush2.msra.mxu0 0.0
    %992 = vmatprep.mubr.f32.mxu0 0.0
    %993 = vmatmul.mubr.f32.gmra.mxu0 %v889
    %v994 = vpop.f32.mrf.mxu0
    %v995 = vadd.f32 %v926, %v994
    %v996 = vpop.f32.mrf.mxu0
    %997 = vmatprep.mubr.f32.mxu0 0.0
    %998 = vmatmul.mubr.f32.gmra.mxu0 %v890
    %v999 = vpop.f32.mrf.mxu0
    %v1000 = vadd.f32 %v926, %v999
    %v1001 = vpop.f32.mrf.mxu0
    %1002 = vmatprep.mubr.f32.mxu0 0.0
    %1003 = vmatmul.mubr.f32.gmra.mxu0 %v891
    %v1004 = vpop.f32.mrf.mxu0
    %v1005 = vadd.f32 %v926, %v1004
    %v1006 = vpop.f32.mrf.mxu0
    %1007 = vmatprep.mubr.f32.mxu0 0.0
    %1008 = vmatmul.mubr.f32.gmra.mxu0 %v892
    %v1009 = vpop.f32.mrf.mxu0
    %v1010 = vadd.f32 %v926, %v1009
    %v1011 = vpop.f32.mrf.mxu0
    %1012 = vmatprep.mubr.f32.mxu0 0.0
    %1013 = vmatmul.mubr.f32.gmra.mxu0 %v893
    %v1014 = vpop.f32.mrf.mxu0
    %v1015 = vadd.f32 %v926, %v1014
    %v1016 = vpop.f32.mrf.mxu0
    %1017 = vmatprep.mubr.f32.mxu0 0.0
    %1018 = vmatmul.mubr.f32.gmra.mxu0 %v894
    %v1019 = vpop.f32.mrf.mxu0
    %v1020 = vadd.f32 %v926, %v1019
    %v1021 = vpop.f32.mrf.mxu0
    %1022 = vmatprep.mubr.f32.mxu0 0.0
    %1023 = vmatmul.mubr.f32.gmra.mxu0 %v895
    %v1024 = vpop.f32.mrf.mxu0
    %v1025 = vadd.f32 %v926, %v1024
    %v1026 = vpop.f32.mrf.mxu0
    %1027 = vmatprep.mubr.f32.mxu0 0.0
    %1028 = vmatmul.mubr.f32.gmra.mxu0 %v896
    %v1029 = vpop.f32.mrf.mxu0
    %v1030 = vadd.f32 %v926, %v1029
    %v1031 = vpop.f32.mrf.mxu0
    %1032 = vmatprep.mubr.f32.mxu0 0.0
    %1033 = vmatmul.mubr.f32.gmra.mxu0 %v897
    %v1034 = vpop.f32.mrf.mxu0
    %v1035 = vadd.f32 %v926, %v1034
    %v1036 = vpop.f32.mrf.mxu0
    %1037 = vmatprep.mubr.f32.mxu0 0.0
    %1038 = vmatmul.mubr.f32.gmra.mxu0 %v898
    %v1039 = vpop.f32.mrf.mxu0
    %v1040 = vadd.f32 %v926, %v1039
    %v1041 = vpop.f32.mrf.mxu0
    %1042 = vmatprep.mubr.f32.mxu0 0.0
    %1043 = vmatmul.mubr.f32.gmra.mxu0 %v899
    %v1044 = vpop.f32.mrf.mxu0
    %v1045 = vadd.f32 %v926, %v1044
    %v1046 = vpop.f32.mrf.mxu0
    %1047 = vmatprep.mubr.f32.mxu0 0.0
    %1048 = vmatmul.mubr.f32.gmra.mxu0 %v900
    %v1049 = vpop.f32.mrf.mxu0
    %v1050 = vadd.f32 %v926, %v1049
    %v1051 = vpop.f32.mrf.mxu0
    %1052 = vmatprep.mubr.f32.mxu0 0.0
    %1053 = vmatmul.mubr.f32.gmra.mxu0 %v901
    %v1054 = vpop.f32.mrf.mxu0
    %v1055 = vadd.f32 %v926, %v1054
    %v1056 = vpop.f32.mrf.mxu0
    %1057 = vmatprep.mubr.f32.mxu0 0.0
    %1058 = vmatmul.mubr.f32.gmra.mxu0 %v902
    %v1059 = vpop.f32.mrf.mxu0
    %v1060 = vadd.f32 %v926, %v1059
    %v1061 = vpop.f32.mrf.mxu0
    %1062 = vmatprep.mubr.f32.mxu0 0.0
    %1063 = vmatmul.mubr.f32.gmra.mxu0 %v903
    %v1064 = vpop.f32.mrf.mxu0
    %v1065 = vadd.f32 %v926, %v1064
    %v1066 = vpop.f32.mrf.mxu0
    %1067 = vmatprep.mubr.f32.mxu0 0.0
    %1068 = vmatmul.mubr.f32.gmra.mxu0 %v904
    %v1069 = vpop.f32.mrf.mxu0
    %v1070 = vadd.f32 %v926, %v1069
    %v1071 = vpop.f32.mrf.mxu0
    %1072 = vdwg.mxu0
    %v1073 = vmul.f32 %v995, 0.01
    %v1074 = vmul.f32 %v1000, 0.01
    %v1075 = vmul.f32 %v1005, 0.01
    %v1076 = vmul.f32 %v1010, 0.01
    %v1077 = vmul.f32 %v1015, 0.01
    %v1078 = vmul.f32 %v1020, 0.01
    %v1079 = vmul.f32 %v1025, 0.01
    %v1080 = vmul.f32 %v1030, 0.01
    %v1081 = vmul.f32 %v1035, 0.01
    %v1082 = vmul.f32 %v1040, 0.01
    %v1083 = vmul.f32 %v1045, 0.01
    %v1084 = vmul.f32 %v1050, 0.01
    %v1085 = vmul.f32 %v1055, 0.01
    %v1086 = vmul.f32 %v1060, 0.01
    %v1087 = vmul.f32 %v1065, 0.01
    %v1088 = vmul.f32 %v1070, 0.01
    %v1089 = vmax.f32 %v995, %v1073
    %v1090 = vmax.f32 %v1000, %v1074
    %v1091 = vmax.f32 %v1005, %v1075
    %v1092 = vmax.f32 %v1010, %v1076
    %v1093 = vmax.f32 %v1015, %v1077
    %v1094 = vmax.f32 %v1020, %v1078
    %v1095 = vmax.f32 %v1025, %v1079
    %v1096 = vmax.f32 %v1030, %v1080
    %v1097 = vmax.f32 %v1035, %v1081
    %v1098 = vmax.f32 %v1040, %v1082
    %v1099 = vmax.f32 %v1045, %v1083
    %v1100 = vmax.f32 %v1050, %v1084
    %v1101 = vmax.f32 %v1055, %v1085
    %v1102 = vmax.f32 %v1060, %v1086
    %v1103 = vmax.f32 %v1065, %v1087
    %v1104 = vmax.f32 %v1070, %v1088
    %v1105 = vld [vmem:[%s5] sm:$0xff]
    %v1106 = vld [vmem:[%s5 + $0x8] sm:$0xff]
    %v1107 = vld [vmem:[%s5 + $0x10] sm:$0xff]
    %v1108 = vld [vmem:[%s5 + $0x18] sm:$0xff]
    %v1109 = vld [vmem:[%s5 + $0x20] sm:$0xff]
    %v1110 = vld [vmem:[%s5 + $0x28] sm:$0xff]
    %v1111 = vld [vmem:[%s5 + $0x30] sm:$0xff]
    %v1112 = vld [vmem:[%s5 + $0x38] sm:$0xff]
    %v1113 = vld [vmem:[%s5 + $0x40] sm:$0xff]
    %v1114 = vld [vmem:[%s5 + $0x48] sm:$0xff]
    %v1115 = vld [vmem:[%s5 + $0x50] sm:$0xff]
    %v1116 = vld [vmem:[%s5 + $0x58] sm:$0xff]
    %v1117 = vld [vmem:[%s5 + $0x60] sm:$0xff]
    %v1118 = vld [vmem:[%s5 + $0x68] sm:$0xff]
    %v1119 = vld [vmem:[%s5 + $0x70] sm:$0xff]
    %v1120 = vld [vmem:[%s5 + $0x78] sm:$0xff]
    %v1121 = vld [vmem:[%s6] sm:$0x1]
    %v1123 = vlaneseq
    %v1124 = vshrl.u32 %v1123, 7
    %v1125 = vsub.s32 0, %v1124
    %v1126 = vrot.slane %v1121, %v1125
    %1128 = vmatprep.subr.mxu0 0.0
    %1129 = vmatpush1.msra.mxu0 %v1120
    %1130 = vmatprep.subr.mxu0 0.0
    %1131 = vmatpush1.msra.mxu0 %v1119
    %1132 = vmatprep.subr.mxu0 0.0
    %1133 = vmatpush1.msra.mxu0 %v1118
    %1134 = vmatprep.subr.mxu0 0.0
    %1135 = vmatpush1.msra.mxu0 %v1117
    %1136 = vmatprep.subr.mxu0 0.0
    %1137 = vmatpush1.msra.mxu0 %v1116
    %1138 = vmatprep.subr.mxu0 0.0
    %1139 = vmatpush1.msra.mxu0 %v1115
    %1140 = vmatprep.subr.mxu0 0.0
    %1141 = vmatpush1.msra.mxu0 %v1114
    %1142 = vmatprep.subr.mxu0 0.0
    %1143 = vmatpush1.msra.mxu0 %v1113
    %1144 = vmatprep.subr.mxu0 0.0
    %1145 = vmatpush1.msra.mxu0 %v1112
    %1146 = vmatprep.subr.mxu0 0.0
    %1147 = vmatpush1.msra.mxu0 %v1111
    %1148 = vmatprep.subr.mxu0 0.0
    %1149 = vmatpush1.msra.mxu0 %v1110
    %1150 = vmatprep.subr.mxu0 0.0
    %1151 = vmatpush1.msra.mxu0 %v1109
    %1152 = vmatprep.subr.mxu0 0.0
    %1153 = vmatpush1.msra.mxu0 %v1108
    %1154 = vmatprep.subr.mxu0 0.0
    %1155 = vmatpush1.msra.mxu0 %v1107
    %1156 = vmatprep.subr.mxu0 0.0
    %1157 = vmatpush1.msra.mxu0 %v1106
    %1158 = vmatprep.subr.mxu0 0.0
    %1159 = vmatpush1.msra.mxu0 %v1105
    %1160 = vmatprep.subr.mxu0 0.0
    %1161 = vmatpush2.msra.mxu0 0.0
    %1162 = vmatprep.subr.mxu0 0.0
    %1163 = vmatpush2.msra.mxu0 0.0
    %1164 = vmatprep.subr.mxu0 0.0
    %1165 = vmatpush2.msra.mxu0 0.0
    %1166 = vmatprep.subr.mxu0 0.0
    %1167 = vmatpush2.msra.mxu0 0.0
    %1168 = vmatprep.subr.mxu0 0.0
    %1169 = vmatpush2.msra.mxu0 0.0
    %1170 = vmatprep.subr.mxu0 0.0
    %1171 = vmatpush2.msra.mxu0 0.0
    %1172 = vmatprep.subr.mxu0 0.0
    %1173 = vmatpush2.msra.mxu0 0.0
    %1174 = vmatprep.subr.mxu0 0.0
    %1175 = vmatpush2.msra.mxu0 0.0
    %1176 = vmatprep.subr.mxu0 0.0
    %1177 = vmatpush2.msra.mxu0 0.0
    %1178 = vmatprep.subr.mxu0 0.0
    %1179 = vmatpush2.msra.mxu0 0.0
    %1180 = vmatprep.subr.mxu0 0.0
    %1181 = vmatpush2.msra.mxu0 0.0
    %1182 = vmatprep.subr.mxu0 0.0
    %1183 = vmatpush2.msra.mxu0 0.0
    %1184 = vmatprep.subr.mxu0 0.0
    %1185 = vmatpush2.msra.mxu0 0.0
    %1186 = vmatprep.subr.mxu0 0.0
    %1187 = vmatpush2.msra.mxu0 0.0
    %1188 = vmatprep.subr.mxu0 0.0
    %1189 = vmatpush2.msra.mxu0 0.0
    %1190 = vmatprep.subr.mxu0 0.0
    %1191 = vmatpush2.msra.mxu0 0.0
    %1192 = vmatprep.mubr.f32.mxu0 0.0
    %1193 = vmatmul.mubr.f32.gmra.mxu0 %v1089
    %v1194 = vpop.f32.mrf.mxu0
    %v1195 = vadd.f32 %v1126, %v1194
    %v1196 = vpop.f32.mrf.mxu0
    %1197 = vmatprep.mubr.f32.mxu0 0.0
    %1198 = vmatmul.mubr.f32.gmra.mxu0 %v1090
    %v1199 = vpop.f32.mrf.mxu0
    %v1200 = vadd.f32 %v1126, %v1199
    %v1201 = vpop.f32.mrf.mxu0
    %1202 = vmatprep.mubr.f32.mxu0 0.0
    %1203 = vmatmul.mubr.f32.gmra.mxu0 %v1091
    %v1204 = vpop.f32.mrf.mxu0
    %v1205 = vadd.f32 %v1126, %v1204
    %v1206 = vpop.f32.mrf.mxu0
    %1207 = vmatprep.mubr.f32.mxu0 0.0
    %1208 = vmatmul.mubr.f32.gmra.mxu0 %v1092
    %v1209 = vpop.f32.mrf.mxu0
    %v1210 = vadd.f32 %v1126, %v1209
    %v1211 = vpop.f32.mrf.mxu0
    %1212 = vmatprep.mubr.f32.mxu0 0.0
    %1213 = vmatmul.mubr.f32.gmra.mxu0 %v1093
    %v1214 = vpop.f32.mrf.mxu0
    %v1215 = vadd.f32 %v1126, %v1214
    %v1216 = vpop.f32.mrf.mxu0
    %1217 = vmatprep.mubr.f32.mxu0 0.0
    %1218 = vmatmul.mubr.f32.gmra.mxu0 %v1094
    %v1219 = vpop.f32.mrf.mxu0
    %v1220 = vadd.f32 %v1126, %v1219
    %v1221 = vpop.f32.mrf.mxu0
    %1222 = vmatprep.mubr.f32.mxu0 0.0
    %1223 = vmatmul.mubr.f32.gmra.mxu0 %v1095
    %v1224 = vpop.f32.mrf.mxu0
    %v1225 = vadd.f32 %v1126, %v1224
    %v1226 = vpop.f32.mrf.mxu0
    %1227 = vmatprep.mubr.f32.mxu0 0.0
    %1228 = vmatmul.mubr.f32.gmra.mxu0 %v1096
    %v1229 = vpop.f32.mrf.mxu0
    %v1230 = vadd.f32 %v1126, %v1229
    %v1231 = vpop.f32.mrf.mxu0
    %1232 = vmatprep.mubr.f32.mxu0 0.0
    %1233 = vmatmul.mubr.f32.gmra.mxu0 %v1097
    %v1234 = vpop.f32.mrf.mxu0
    %v1235 = vadd.f32 %v1126, %v1234
    %v1236 = vpop.f32.mrf.mxu0
    %1237 = vmatprep.mubr.f32.mxu0 0.0
    %1238 = vmatmul.mubr.f32.gmra.mxu0 %v1098
    %v1239 = vpop.f32.mrf.mxu0
    %v1240 = vadd.f32 %v1126, %v1239
    %v1241 = vpop.f32.mrf.mxu0
    %1242 = vmatprep.mubr.f32.mxu0 0.0
    %1243 = vmatmul.mubr.f32.gmra.mxu0 %v1099
    %v1244 = vpop.f32.mrf.mxu0
    %v1245 = vadd.f32 %v1126, %v1244
    %v1246 = vpop.f32.mrf.mxu0
    %1247 = vmatprep.mubr.f32.mxu0 0.0
    %1248 = vmatmul.mubr.f32.gmra.mxu0 %v1100
    %v1249 = vpop.f32.mrf.mxu0
    %v1250 = vadd.f32 %v1126, %v1249
    %v1251 = vpop.f32.mrf.mxu0
    %1252 = vmatprep.mubr.f32.mxu0 0.0
    %1253 = vmatmul.mubr.f32.gmra.mxu0 %v1101
    %v1254 = vpop.f32.mrf.mxu0
    %v1255 = vadd.f32 %v1126, %v1254
    %v1256 = vpop.f32.mrf.mxu0
    %1257 = vmatprep.mubr.f32.mxu0 0.0
    %1258 = vmatmul.mubr.f32.gmra.mxu0 %v1102
    %v1259 = vpop.f32.mrf.mxu0
    %v1260 = vadd.f32 %v1126, %v1259
    %v1261 = vpop.f32.mrf.mxu0
    %1262 = vmatprep.mubr.f32.mxu0 0.0
    %1263 = vmatmul.mubr.f32.gmra.mxu0 %v1103
    %v1264 = vpop.f32.mrf.mxu0
    %v1265 = vadd.f32 %v1126, %v1264
    %v1266 = vpop.f32.mrf.mxu0
    %1267 = vmatprep.mubr.f32.mxu0 0.0
    %1268 = vmatmul.mubr.f32.gmra.mxu0 %v1104
    %v1269 = vpop.f32.mrf.mxu0
    %v1270 = vadd.f32 %v1126, %v1269
    %v1271 = vpop.f32.mrf.mxu0
    %1272 = vdwg.mxu0
    %v1273 = vlaneseq
    %v1274 = vand.u32 %v1273, 127
    %vm1275 = vcmp.ge.s32.totalorder %v1274, 8
    %v1276 = vmax.f32 %v1195, -10.0
    %v1277 = vmax.f32 %v1200, -10.0
    %v1278 = vmax.f32 %v1205, -10.0
    %v1279 = vmax.f32 %v1210, -10.0
    %v1280 = vmax.f32 %v1215, -10.0
    %v1281 = vmax.f32 %v1220, -10.0
    %v1282 = vmax.f32 %v1225, -10.0
    %v1283 = vmax.f32 %v1230, -10.0
    %v1284 = vmax.f32 %v1235, -10.0
    %v1285 = vmax.f32 %v1240, -10.0
    %v1286 = vmax.f32 %v1245, -10.0
    %v1287 = vmax.f32 %v1250, -10.0
    %v1288 = vmax.f32 %v1255, -10.0
    %v1289 = vmax.f32 %v1260, -10.0
    %v1290 = vmax.f32 %v1265, -10.0
    %v1291 = vmax.f32 %v1270, -10.0
    %v1292 = vmin.f32 %v1276, 4.0
    %v1293 = vmin.f32 %v1277, 4.0
    %v1294 = vmin.f32 %v1278, 4.0
    %v1295 = vmin.f32 %v1279, 4.0
    %v1296 = vmin.f32 %v1280, 4.0
    %v1297 = vmin.f32 %v1281, 4.0
    %v1298 = vmin.f32 %v1282, 4.0
    %v1299 = vmin.f32 %v1283, 4.0
    %v1300 = vmin.f32 %v1284, 4.0
    %v1301 = vmin.f32 %v1285, 4.0
    %v1302 = vmin.f32 %v1286, 4.0
    %v1303 = vmin.f32 %v1287, 4.0
    %v1304 = vmin.f32 %v1288, 4.0
    %v1305 = vmin.f32 %v1289, 4.0
    %v1306 = vmin.f32 %v1290, 4.0
    %v1307 = vmin.f32 %v1291, 4.0
    %v1308 = vsel %vm1275, %v1292, %v1195
    %v1309 = vsel %vm1275, %v1293, %v1200
    %v1310 = vsel %vm1275, %v1294, %v1205
    %v1311 = vsel %vm1275, %v1295, %v1210
    %v1312 = vsel %vm1275, %v1296, %v1215
    %v1313 = vsel %vm1275, %v1297, %v1220
    %v1314 = vsel %vm1275, %v1298, %v1225
    %v1315 = vsel %vm1275, %v1299, %v1230
    %v1316 = vsel %vm1275, %v1300, %v1235
    %v1317 = vsel %vm1275, %v1301, %v1240
    %v1318 = vsel %vm1275, %v1302, %v1245
    %v1319 = vsel %vm1275, %v1303, %v1250
    %v1320 = vsel %vm1275, %v1304, %v1255
    %v1321 = vsel %vm1275, %v1305, %v1260
    %v1322 = vsel %vm1275, %v1306, %v1265
    %v1323 = vsel %vm1275, %v1307, %v1270
    %1324 = vst [vmem:[#allocation2] sm:$0xff] %v1308
    %1325 = vst [vmem:[#allocation2 + $0x8] sm:$0xff] %v1309
    %1326 = vst [vmem:[#allocation2 + $0x10] sm:$0xff] %v1310
    %1327 = vst [vmem:[#allocation2 + $0x18] sm:$0xff] %v1311
    %1328 = vst [vmem:[#allocation2 + $0x20] sm:$0xff] %v1312
    %1329 = vst [vmem:[#allocation2 + $0x28] sm:$0xff] %v1313
    %1330 = vst [vmem:[#allocation2 + $0x30] sm:$0xff] %v1314
    %1331 = vst [vmem:[#allocation2 + $0x38] sm:$0xff] %v1315
    %1332 = vst [vmem:[#allocation2 + $0x40] sm:$0xff] %v1316
    %1333 = vst [vmem:[#allocation2 + $0x48] sm:$0xff] %v1317
    %1334 = vst [vmem:[#allocation2 + $0x50] sm:$0xff] %v1318
    %1335 = vst [vmem:[#allocation2 + $0x58] sm:$0xff] %v1319
    %1336 = vst [vmem:[#allocation2 + $0x60] sm:$0xff] %v1320
    %1337 = vst [vmem:[#allocation2 + $0x68] sm:$0xff] %v1321
    %1338 = vst [vmem:[#allocation2 + $0x70] sm:$0xff] %v1322
    %1339 = vst [vmem:[#allocation2 + $0x78] sm:$0xff] %v1323
    // Predicated region
    $region30: #{tpu_custom_call.1} parent=1 // pred_check
      _
    $region31: #{tpu_custom_call.1} parent=1 // pred_check_branch
      %1341 = sbr.rel (0) target = $region33
    $region32: #{tpu_custom_call.1} parent=1 // pred_region
      %s1343 = ssub.s32 2048, 2048
      %1344 = vsyncadd [#allocation3], %s1343
      %s1345 = sshll.u32 [#allocation2], 4
      %s1346 = int_to_ptr.vmem [resolvable:$true] %s1345
      %1351 = dma.vmem_to_hbm [thread:$0]  %s1346, 2048, %s7, [#allocation3], 128, 128, 8
    $region33: #{tpu_custom_call.1} parent=1 // pred_fallthru
      _
    // Predicated region
    $region34: #{tpu_custom_call.1} parent=1 // pred_check
      _
    $region35: #{tpu_custom_call.1} parent=1 // pred_check_branch
      %1353 = sbr.rel (0) target = $region37
    $region36: #{tpu_custom_call.1} parent=1 // pred_region
      %1354 = dma.done [#allocation3], 2048
    $region37: #{tpu_custom_call.1} parent=1 // pred_fallthru
      _
    %1355 = vsyncpa [#allocation3], 1

</llo_original>
